<compile_context>
chip_gen: v7x
topology: tpu7x:2x2x1
jax: 0.10.0
libtpu: 0.0.40
codegen_flags: <defaults>
</compile_context>

<pallas_src>
import functools
import math

import jax
import jax.numpy as jnp
from jax.experimental import pallas as pl
from jax.experimental.pallas import tpu as pltpu


META_W = 128  # metadata lanes: [0:2]=expert weights, [2:13]=router logits, rest pad


def _gelu_tanh(x):
    return 0.5 * x * (1.0 + jnp.tanh(0.7978845608028654 * (x + 0.044715 * x * x * x)))


def _pick_block_b(batch):
    """Largest divisor of `batch` that keeps >= 2 grid steps (v7x dual
    TensorCores), capped at 8 batches per step."""
    if batch < 2:
        return 1
    best = 1
    for cand in range(2, min(batch // 2, 8) + 1):
        if batch % cand == 0:
            best = cand
    return best


# ---------------------------------------------------------------------------
# Single fused kernel: memory read -> routers -> experts -> fusion -> context
# ---------------------------------------------------------------------------
def velora_fused_kernel(x_ref, bd_ref, mem_ref, memt_ref, wr_ref, ba_ref,
                        w1_ref, b1_ref, w2_ref, b2_ref, wc_ref, bc_ref,
                        out_ref, meta_ref, *, scale, ff_dim, block_b,
                        seq_len, hidden, mm_dtype):
    f32 = jnp.float32
    Bb, S, H, F = block_b, seq_len, hidden, ff_dim
    R = Bb * S                                 # rows in this grid step

    x = x_ref[0]                               # (R, H)   raw hidden states
    bd = bd_ref[0]                             # (Bb, R)  block-diagonal mask
    mem = mem_ref[...]                         # (M, H)
    mem_t = memt_ref[...]                      # (H, M)

    xm = x.astype(mm_dtype)

    # --- 1) WorkingMemory read + residual enhancement ----------------------
    scores = jnp.dot(xm, mem_t.astype(mm_dtype),
                     preferred_element_type=f32) * scale               # (R, M)
    m = scores.max(axis=-1, keepdims=True)
    p = jnp.exp(scores - m)
    attn = p * pl.reciprocal(p.sum(axis=-1, keepdims=True), approx=True)
    mem_out = jnp.dot(attn.astype(mm_dtype), mem.astype(mm_dtype),
                      preferred_element_type=f32)                      # (R, H)
    enhanced = x + 0.2 * mem_out                                       # (R, H)

    # --- 2) Routers: fused masked mean-pool + single block-structured dot --
    inv_denom = 1.0 / jnp.maximum(bd.sum(axis=-1, keepdims=True), 1.0)  # (Bb,1)
    cat_ex = jnp.concatenate([enhanced, x], axis=1)                     # (R, 2H)
    pooled = jnp.dot(bd.astype(mm_dtype), cat_ex.astype(mm_dtype),
                     preferred_element_type=f32) * inv_denom            # (Bb, 2H)
    # W_router rows 0:H -> primary head (cols 0:2, from enhanced pooled)
    #          rows H:2H -> domain head (cols 2:11, from raw pooled)
    logits = jnp.dot(pooled.astype(mm_dtype), wr_ref[...].astype(mm_dtype),
                     preferred_element_type=f32) + ba_ref[...]          # (Bb, 11)

    primary_logits = logits[:, 0:2]                                     # (Bb, 2)
    pm = primary_logits.max(axis=-1, keepdims=True)
    pe = jnp.exp(primary_logits - pm)
    expert_w = pe / pe.sum(axis=-1, keepdims=True)                      # (Bb, 2)

    # --- 3) Both experts in one pass; fusion folded in via VPU selects -----
    h1 = jnp.dot(xm, w1_ref[...].astype(mm_dtype),
                 preferred_element_type=f32) + b1_ref[...]              # (R, 2F)
    h1 = _gelu_tanh(h1)

    # Per-row (per-batch) fusion weights, pure VPU (no tiny MXU pushes).
    row_idx = jax.lax.broadcasted_iota(jnp.int32, (R, 1), 0)
    w0_rows = jnp.zeros((R, 1), f32)
    w1_rows = jnp.zeros((R, 1), f32)
    for b in range(Bb):                      # static unroll, Bb is tiny
        in_b = (row_idx >= b * S) & (row_idx < (b + 1) * S)
        w0_rows = jnp.where(in_b, expert_w[b:b + 1, 0:1], w0_rows)
        w1_rows = jnp.where(in_b, expert_w[b:b + 1, 1:2], w1_rows)

    lane = jax.lax.broadcasted_iota(jnp.int32, (R, 2 * F), 1)
    h1 = h1 * jnp.where(lane < F, w0_rows, w1_rows)                     # (R, 2F)
    b2_rows = w0_rows * b2_ref[0:1, :] + w1_rows * b2_ref[1:2, :]       # (R, H)

    fused = jnp.dot(h1.astype(mm_dtype), w2_ref[...].astype(mm_dtype),
                    preferred_element_type=f32) + b2_rows               # (R, H)

    # --- 4) ContextManager + final average ----------------------------------
    ctx = jnp.tanh(jnp.dot(fused.astype(mm_dtype), wc_ref[...].astype(mm_dtype),
                           preferred_element_type=f32) + bc_ref[...])
    final = (fused + ctx) * 0.5                                         # (R, H)

    # --- 5) Lane-dense stores -----------------------------------------------
    h_pad = out_ref.shape[2]
    if h_pad > H:
        final = jnp.concatenate(
            [final, jnp.zeros((R, h_pad - H), f32)], axis=1)            # (R, h_pad)
    out_ref[0] = final

    meta_w = meta_ref.shape[2]
    meta_ref[0] = jnp.concatenate(
        [expert_w, logits, jnp.zeros((Bb, meta_w - 13), f32)], axis=1)  # one store


# ---------------------------------------------------------------------------
# VELORA forward (single pallas_call + small JAX glue for metadata)
# ---------------------------------------------------------------------------
def velora_forward(params, hidden_states, attention_mask=None, *,
                   matmul_dtype=jnp.float32):
    is_sequence = hidden_states.ndim == 3
    if not is_sequence:
        hidden_states = hidden_states[:, None, :]
        if attention_mask is not None:
            attention_mask = attention_mask[:, None]
    B, S, H = hidden_states.shape
    if attention_mask is None:
        attention_mask = jnp.ones((B, S), jnp.float32)
    mask = attention_mask.astype(jnp.float32)

    M = params["memory_bank"].shape[0]
    F = params["w1"].shape[2]

    Bb = _pick_block_b(B)            # batches per grid step (grid stays >= 2)
    nb = B // Bb
    R = Bb * S
    H_pad = ((H + 127) // 128) * 128

    # Block-diagonal pooling mask: (nb, Bb, Bb*S); row i of block n holds the
    # attention mask of batch n*Bb+i in columns i*S:(i+1)*S, zeros elsewhere.
    maskb = mask.reshape(nb, Bb, S)
    eye = jnp.eye(Bb, dtype=jnp.float32)
    bd = (maskb[:, :, None, :] * eye[None, :, :, None]).reshape(nb, Bb, R)

    x3 = hidden_states.astype(jnp.float32).reshape(nb, R, H)

    # One-time weight packing (outside the kernel).
    w_router = jnp.zeros((2 * H, 11), jnp.float32)
    w_router = w_router.at[0:H, 0:2].set(params["w_primary"])
    w_router = w_router.at[H:2 * H, 2:11].set(params["w_domain"])
    b_all = jnp.concatenate([params["b_primary"], params["b_domain"]], axis=1)  # (1, 11)
    w1cat = jnp.concatenate([params["w1"][0], params["w1"][1]], axis=1)         # (H, 2F)
    b1cat = jnp.concatenate([params["b1"][0], params["b1"][1]], axis=1)         # (1, 2F)
    w2stk = jnp.concatenate([params["w2"][0], params["w2"][1]], axis=0)         # (2F, H)
    b2stk = jnp.concatenate([params["b2"][0], params["b2"][1]], axis=0)         # (2, H)
    mem = params["memory_bank"]
    mem_t = mem.T                                                               # (H, M)

    kern = functools.partial(
        velora_fused_kernel, scale=1.0 / math.sqrt(H), ff_dim=F, block_b=Bb,
        seq_len=S, hidden=H, mm_dtype=matmul_dtype)

    out3, meta3 = pl.pallas_call(
        kern,
        out_shape=(jax.ShapeDtypeStruct((nb, R, H_pad), jnp.float32),
                   jax.ShapeDtypeStruct((nb, Bb, META_W), jnp.float32)),
        grid=(nb,),
        in_specs=[
            pl.BlockSpec((1, R, H), lambda n: (n, 0, 0)),        # hidden states
            pl.BlockSpec((1, Bb, R), lambda n: (n, 0, 0)),       # block-diag mask
            pl.BlockSpec((M, H), lambda n: (0, 0)),              # memory bank
            pl.BlockSpec((H, M), lambda n: (0, 0)),              # memory bank^T
            pl.BlockSpec((2 * H, 11), lambda n: (0, 0)),         # router weights
            pl.BlockSpec((1, 11), lambda n: (0, 0)),             # router bias
            pl.BlockSpec((H, 2 * F), lambda n: (0, 0)),          # expert W1 (concat)
            pl.BlockSpec((1, 2 * F), lambda n: (0, 0)),          # expert b1 (concat)
            pl.BlockSpec((2 * F, H), lambda n: (0, 0)),          # expert W2 (stacked)
            pl.BlockSpec((2, H), lambda n: (0, 0)),              # expert b2 (stacked)
            pl.BlockSpec((H, H), lambda n: (0, 0)),              # context W
            pl.BlockSpec((1, H), lambda n: (0, 0)),              # context b
        ],
        out_specs=(pl.BlockSpec((1, R, H_pad), lambda n: (n, 0, 0)),
                   pl.BlockSpec((1, Bb, META_W), lambda n: (n, 0, 0))),
        compiler_params=pltpu.CompilerParams(dimension_semantics=("parallel",)),
    )(x3, bd, mem, mem_t, w_router, b_all, w1cat, b1cat, w2stk, b2stk,
      params["w_ctx"], params["b_ctx"])

    # Lane-dense output: slice off the pad and restore (B, S, H).
    final_output = out3.reshape(B * S, H_pad)[:, :H].reshape(B, S, H)

    meta2 = meta3.reshape(B, META_W)
    expert_weights = meta2[:, 0:2]                       # (B, 2)
    domain_logits = meta2[:, 4:13]                       # (B, 9) (= logits[:, 2:11])
    primary_domain = jnp.argmax(expert_weights, axis=-1)
    op_logits = domain_logits[:, 0:4]
    operands = domain_logits[:, 4:6]
    task_logits = domain_logits[:, 6:9]
    operation = jnp.argmax(op_logits, axis=-1)
    task = jnp.argmax(task_logits, axis=-1)

    metadata = {
        "primary_routing": {"primary_domain": primary_domain,
                            "expert_weights": expert_weights},
        "expert_routing": {"operation": operation, "operands": operands,
                           "task": task},
        "fusion": {"expert_weights": expert_weights},
        "memory": {},
    }
    if not is_sequence:
        final_output = final_output[:, 0, :]
    return final_output, metadata


# ---------------------------------------------------------------------------
# Deterministic parameter construction
# ---------------------------------------------------------------------------
def make_params(key, hidden_dim=32, ff_dim=64, memory_size=16):
    ks = jax.random.split(key, 12)

    def init(k, shape, scale):
        return jax.random.normal(k, shape, jnp.float32) * scale

    H, F, M = hidden_dim, ff_dim, memory_size
    return {
        "memory_bank": init(ks[0], (M, H), 1.0 / math.sqrt(H)),
        "w_primary":   init(ks[1], (H, 2), 1.0 / math.sqrt(H)),
        "b_primary":   jnp.zeros((1, 2), jnp.float32),
        "w_domain":    init(ks[2], (H, 9), 1.0 / math.sqrt(H)),
        "b_domain":    jnp.zeros((1, 9), jnp.float32),
        "w1":          init(ks[3], (2, H, F), 1.0 / math.sqrt(H)),
        "b1":          jnp.zeros((2, 1, F), jnp.float32),
        "w2":          init(ks[4], (2, F, H), 1.0 / math.sqrt(F)),
        "b2":          jnp.zeros((2, 1, H), jnp.float32),
        "w_ctx":       init(ks[5], (H, H), 1.0 / math.sqrt(H)),
        "b_ctx":       jnp.zeros((1, H), jnp.float32),
    }


if __name__ == "__main__":
    B, S, H = 2, 8, 32
    key = jax.random.PRNGKey(0)
    k_param, k_x = jax.random.split(key)
    params = make_params(k_param, hidden_dim=H, ff_dim=64, memory_size=16)

    hidden_states = jax.random.normal(k_x, (B, S, H), jnp.float32)
    attention_mask = jnp.ones((B, S), jnp.float32)

    out, meta = velora_forward(params, hidden_states, attention_mask)
    jax.block_until_ready(out)
    jax.block_until_ready(meta["primary_routing"]["expert_weights"])
    assert out.shape == (B, S, H)
    assert meta["primary_routing"]["expert_weights"].shape == (B, 2)
    assert bool(jnp.all(jnp.isfinite(out)))
    print("KERNEL_OK")
</pallas_src>

<mosaic_0001>
module attributes {stable_mosaic.version = 11 : i64} {
  func.func @velora_fused_kernel(%arg0: i32, %arg1: memref<1x8x32xf32, #tpu.memory_space<vmem>>, %arg2: memref<1x1x8xf32, #tpu.memory_space<vmem>>, %arg3: memref<16x32xf32, #tpu.memory_space<vmem>>, %arg4: memref<32x16xf32, #tpu.memory_space<vmem>>, %arg5: memref<64x11xf32, #tpu.memory_space<vmem>>, %arg6: memref<1x11xf32, #tpu.memory_space<vmem>>, %arg7: memref<32x128xf32, #tpu.memory_space<vmem>>, %arg8: memref<1x128xf32, #tpu.memory_space<vmem>>, %arg9: memref<128x32xf32, #tpu.memory_space<vmem>>, %arg10: memref<2x32xf32, #tpu.memory_space<vmem>>, %arg11: memref<32x32xf32, #tpu.memory_space<vmem>>, %arg12: memref<1x32xf32, #tpu.memory_space<vmem>>, %arg13: memref<1x8x128xf32, #tpu.memory_space<vmem>>, %arg14: memref<1x1x128xf32, #tpu.memory_space<vmem>>) attributes {dimension_semantics = [#tpu.dimension_semantics<parallel>], iteration_bounds = array<i64: 2>, scalar_prefetch = 0 : i64, scratch_operands = 0 : i64, tpu.core_type = #tpu.core_type<tc>, window_params = [{transform_indices = @transform_0, window_bounds = array<i64: 1, 8, 32>}, {transform_indices = @transform_1, window_bounds = array<i64: 1, 1, 8>}, {pipeline_mode = #tpu.pipeline_mode<synchronous>, transform_indices = @transform_2, window_bounds = array<i64: 16, 32>}, {pipeline_mode = #tpu.pipeline_mode<synchronous>, transform_indices = @transform_3, window_bounds = array<i64: 32, 16>}, {pipeline_mode = #tpu.pipeline_mode<synchronous>, transform_indices = @transform_4, window_bounds = array<i64: 64, 11>}, {pipeline_mode = #tpu.pipeline_mode<synchronous>, transform_indices = @transform_5, window_bounds = array<i64: 1, 11>}, {pipeline_mode = #tpu.pipeline_mode<synchronous>, transform_indices = @transform_6, window_bounds = array<i64: 32, 128>}, {pipeline_mode = #tpu.pipeline_mode<synchronous>, transform_indices = @transform_7, window_bounds = array<i64: 1, 128>}, {pipeline_mode = #tpu.pipeline_mode<synchronous>, transform_indices = @transform_8, window_bounds = array<i64: 128, 32>}, {pipeline_mode = #tpu.pipeline_mode<synchronous>, transform_indices = @transform_9, window_bounds = array<i64: 2, 32>}, {pipeline_mode = #tpu.pipeline_mode<synchronous>, transform_indices = @transform_10, window_bounds = array<i64: 32, 32>}, {pipeline_mode = #tpu.pipeline_mode<synchronous>, transform_indices = @transform_11, window_bounds = array<i64: 1, 32>}, {transform_indices = @transform_12, window_bounds = array<i64: 1, 8, 128>}, {transform_indices = @transform_13, window_bounds = array<i64: 1, 1, 128>}]} {
    %c0 = arith.constant 0 : index
    %c0_0 = arith.constant 0 : index
    %c0_1 = arith.constant 0 : index
    %0 = vector.load %arg1[%c0, %c0_0, %c0_1] : memref<1x8x32xf32, #tpu.memory_space<vmem>>, vector<1x8x32xf32>
    %1 = vector.shape_cast %0 : vector<1x8x32xf32> to vector<8x32xf32>
    %c0_2 = arith.constant 0 : index
    %c0_3 = arith.constant 0 : index
    %c0_4 = arith.constant 0 : index
    %2 = vector.load %arg2[%c0_2, %c0_3, %c0_4] : memref<1x1x8xf32, #tpu.memory_space<vmem>>, vector<1x1x8xf32>
    %3 = vector.shape_cast %2 : vector<1x1x8xf32> to vector<1x8xf32>
    %c0_5 = arith.constant 0 : index
    %c0_6 = arith.constant 0 : index
    %4 = vector.load %arg3[%c0_5, %c0_6] : memref<16x32xf32, #tpu.memory_space<vmem>>, vector<16x32xf32>
    %c0_7 = arith.constant 0 : index
    %c0_8 = arith.constant 0 : index
    %5 = vector.load %arg4[%c0_7, %c0_8] : memref<32x16xf32, #tpu.memory_space<vmem>>, vector<32x16xf32>
    %cst = arith.constant dense<0.000000e+00> : vector<8x16xf32>
    %6 = tpu.matmul %1, %5, %cst {dimension_numbers = #tpu.dot_dimension_numbers<[1], [0], [0], [1], [0, 0, 1, 1], [], []>} : vector<8x32xf32>, vector<32x16xf32>, vector<8x16xf32> -> vector<8x16xf32>
    %cst_9 = arith.constant 0.176776692 : f32
    %7 = vector.broadcast %cst_9 : f32 to vector<8x16xf32>
    %8 = arith.mulf %6, %7 : vector<8x16xf32>
    %cst_10 = arith.constant dense<0xFF800000> : vector<8xf32>
    %9 = vector.multi_reduction <maximumf>, %8, %cst_10 [1] : vector<8x16xf32> to vector<8xf32>
    %10 = vector.shape_cast %9 : vector<8xf32> to vector<8x1xf32>
    %11 = vector.broadcast %10 : vector<8x1xf32> to vector<8x16xf32>
    %12 = arith.subf %8, %11 : vector<8x16xf32>
    %13 = math.exp %12 : vector<8x16xf32>
    %cst_11 = arith.constant dense<0.000000e+00> : vector<8xf32>
    %14 = vector.multi_reduction <add>, %13, %cst_11 [1] : vector<8x16xf32> to vector<8xf32>
    %15 = vector.shape_cast %14 : vector<8xf32> to vector<8x1xf32>
    %16 = tpu.reciprocal %15 {approx = true} : vector<8x1xf32> -> vector<8x1xf32>
    %17 = vector.broadcast %16 : vector<8x1xf32> to vector<8x16xf32>
    %18 = arith.mulf %13, %17 : vector<8x16xf32>
    %cst_12 = arith.constant dense<0.000000e+00> : vector<8x32xf32>
    %19 = tpu.matmul %18, %4, %cst_12 {dimension_numbers = #tpu.dot_dimension_numbers<[1], [0], [0], [1], [0, 0, 1, 1], [], []>} : vector<8x16xf32>, vector<16x32xf32>, vector<8x32xf32> -> vector<8x32xf32>
    %cst_13 = arith.constant 2.000000e-01 : f32
    %20 = vector.broadcast %cst_13 : f32 to vector<8x32xf32>
    %21 = arith.mulf %20, %19 : vector<8x32xf32>
    %22 = arith.addf %1, %21 : vector<8x32xf32>
    %cst_14 = arith.constant dense<0.000000e+00> : vector<1xf32>
    %23 = vector.multi_reduction <add>, %3, %cst_14 [1] : vector<1x8xf32> to vector<1xf32>
    %24 = vector.shape_cast %23 : vector<1xf32> to vector<1x1xf32>
    %cst_15 = arith.constant 1.000000e+00 : f32
    %25 = vector.broadcast %cst_15 : f32 to vector<1x1xf32>
    %26 = arith.maximumf %24, %25 : vector<1x1xf32>
    %cst_16 = arith.constant 1.000000e+00 : f32
    %27 = vector.broadcast %cst_16 : f32 to vector<1x1xf32>
    %28 = arith.divf %27, %26 : vector<1x1xf32>
    %29 = tpu.concatenate %22, %1 in 1 : vector<8x32xf32>, vector<8x32xf32> -> vector<8x64xf32>
    %cst_17 = arith.constant dense<0.000000e+00> : vector<1x64xf32>
    %30 = tpu.matmul %3, %29, %cst_17 {dimension_numbers = #tpu.dot_dimension_numbers<[1], [0], [0], [1], [0, 0, 1, 1], [], []>} : vector<1x8xf32>, vector<8x64xf32>, vector<1x64xf32> -> vector<1x64xf32>
    %31 = vector.broadcast %28 : vector<1x1xf32> to vector<1x64xf32>
    %32 = arith.mulf %30, %31 : vector<1x64xf32>
    %c0_18 = arith.constant 0 : index
    %c0_19 = arith.constant 0 : index
    %33 = vector.load %arg5[%c0_18, %c0_19] : memref<64x11xf32, #tpu.memory_space<vmem>>, vector<64x11xf32>
    %cst_20 = arith.constant dense<0.000000e+00> : vector<1x11xf32>
    %34 = tpu.matmul %32, %33, %cst_20 {dimension_numbers = #tpu.dot_dimension_numbers<[1], [0], [0], [1], [0, 0, 1, 1], [], []>} : vector<1x64xf32>, vector<64x11xf32>, vector<1x11xf32> -> vector<1x11xf32>
    %c0_21 = arith.constant 0 : index
    %c0_22 = arith.constant 0 : index
    %35 = vector.load %arg6[%c0_21, %c0_22] : memref<1x11xf32, #tpu.memory_space<vmem>>, vector<1x11xf32>
    %36 = arith.addf %34, %35 : vector<1x11xf32>
    %37 = vector.extract_strided_slice %36 {offsets = [0, 0], sizes = [1, 2], strides = [1, 1]} : vector<1x11xf32> to vector<1x2xf32>
    %cst_23 = arith.constant dense<0xFF800000> : vector<1xf32>
    %38 = vector.multi_reduction <maximumf>, %37, %cst_23 [1] : vector<1x2xf32> to vector<1xf32>
    %39 = vector.shape_cast %38 : vector<1xf32> to vector<1x1xf32>
    %40 = vector.broadcast %39 : vector<1x1xf32> to vector<1x2xf32>
    %41 = arith.subf %37, %40 : vector<1x2xf32>
    %42 = math.exp %41 : vector<1x2xf32>
    %cst_24 = arith.constant dense<0.000000e+00> : vector<1xf32>
    %43 = vector.multi_reduction <add>, %42, %cst_24 [1] : vector<1x2xf32> to vector<1xf32>
    %44 = vector.shape_cast %43 : vector<1xf32> to vector<1x1xf32>
    %45 = vector.broadcast %44 : vector<1x1xf32> to vector<1x2xf32>
    %46 = arith.divf %42, %45 : vector<1x2xf32>
    %c0_25 = arith.constant 0 : index
    %c0_26 = arith.constant 0 : index
    %47 = vector.load %arg7[%c0_25, %c0_26] : memref<32x128xf32, #tpu.memory_space<vmem>>, vector<32x128xf32>
    %cst_27 = arith.constant dense<0.000000e+00> : vector<8x128xf32>
    %48 = tpu.matmul %1, %47, %cst_27 {dimension_numbers = #tpu.dot_dimension_numbers<[1], [0], [0], [1], [0, 0, 1, 1], [], []>} : vector<8x32xf32>, vector<32x128xf32>, vector<8x128xf32> -> vector<8x128xf32>
    %c0_28 = arith.constant 0 : index
    %c0_29 = arith.constant 0 : index
    %49 = vector.load %arg8[%c0_28, %c0_29] : memref<1x128xf32, #tpu.memory_space<vmem>>, vector<1x128xf32>
    %50 = vector.broadcast %49 : vector<1x128xf32> to vector<8x128xf32>
    %51 = arith.addf %48, %50 : vector<8x128xf32>
    %cst_30 = arith.constant 5.000000e-01 : f32
    %52 = vector.broadcast %cst_30 : f32 to vector<8x128xf32>
    %53 = arith.mulf %52, %51 : vector<8x128xf32>
    %cst_31 = arith.constant 4.471500e-02 : f32
    %54 = vector.broadcast %cst_31 : f32 to vector<8x128xf32>
    %55 = arith.mulf %54, %51 : vector<8x128xf32>
    %56 = arith.mulf %55, %51 : vector<8x128xf32>
    %57 = arith.mulf %56, %51 : vector<8x128xf32>
    %58 = arith.addf %51, %57 : vector<8x128xf32>
    %cst_32 = arith.constant 0.797884583 : f32
    %59 = vector.broadcast %cst_32 : f32 to vector<8x128xf32>
    %60 = arith.mulf %59, %58 : vector<8x128xf32>
    %61 = math.tanh %60 : vector<8x128xf32>
    %cst_33 = arith.constant 1.000000e+00 : f32
    %62 = vector.broadcast %cst_33 : f32 to vector<8x128xf32>
    %63 = arith.addf %62, %61 : vector<8x128xf32>
    %64 = arith.mulf %53, %63 : vector<8x128xf32>
    %65 = tpu.iota {dimensions = array<i32: 0>} : vector<8x1xi32>
    %cst_34 = arith.constant 0.000000e+00 : f32
    %66 = vector.broadcast %cst_34 : f32 to vector<8x1xf32>
    %cst_35 = arith.constant 0.000000e+00 : f32
    %67 = vector.broadcast %cst_35 : f32 to vector<8x1xf32>
    %c0_i32 = arith.constant 0 : i32
    %68 = vector.broadcast %c0_i32 : i32 to vector<8x1xi32>
    %69 = arith.cmpi sge, %65, %68 : vector<8x1xi32>
    %c8_i32 = arith.constant 8 : i32
    %70 = vector.broadcast %c8_i32 : i32 to vector<8x1xi32>
    %71 = arith.cmpi slt, %65, %70 : vector<8x1xi32>
    %72 = arith.andi %69, %71 : vector<8x1xi1>
    %73 = vector.extract_strided_slice %46 {offsets = [0, 0], sizes = [1, 1], strides = [1, 1]} : vector<1x2xf32> to vector<1x1xf32>
    %74 = vector.shape_cast %73 : vector<1x1xf32> to vector<1x1xf32>
    %75 = vector.broadcast %74 : vector<1x1xf32> to vector<8x1xf32>
    %76 = arith.select %72, %75, %66 : vector<8x1xi1>, vector<8x1xf32>
    %77 = vector.extract_strided_slice %46 {offsets = [0, 1], sizes = [1, 1], strides = [1, 1]} : vector<1x2xf32> to vector<1x1xf32>
    %78 = vector.shape_cast %77 : vector<1x1xf32> to vector<1x1xf32>
    %79 = vector.broadcast %78 : vector<1x1xf32> to vector<8x1xf32>
    %80 = arith.select %72, %79, %67 : vector<8x1xi1>, vector<8x1xf32>
    %81 = tpu.iota {dimensions = array<i32: 1>} : vector<8x128xi32>
    %c64_i32 = arith.constant 64 : i32
    %82 = vector.broadcast %c64_i32 : i32 to vector<8x128xi32>
    %83 = arith.cmpi slt, %81, %82 : vector<8x128xi32>
    %84 = vector.shape_cast %76 : vector<8x1xf32> to vector<8x1xf32>
    %85 = vector.broadcast %84 : vector<8x1xf32> to vector<8x128xf32>
    %86 = vector.shape_cast %80 : vector<8x1xf32> to vector<8x1xf32>
    %87 = vector.broadcast %86 : vector<8x1xf32> to vector<8x128xf32>
    %88 = arith.select %83, %85, %87 : vector<8x128xi1>, vector<8x128xf32>
    %89 = arith.mulf %64, %88 : vector<8x128xf32>
    %c0_36 = arith.constant 0 : index
    %c0_37 = arith.constant 0 : index
    %90 = vector.load %arg10[%c0_36, %c0_37] : memref<2x32xf32, #tpu.memory_space<vmem>>, vector<1x32xf32>
    %91 = vector.broadcast %76 : vector<8x1xf32> to vector<8x32xf32>
    %92 = vector.broadcast %90 : vector<1x32xf32> to vector<8x32xf32>
    %93 = arith.mulf %91, %92 : vector<8x32xf32>
    %c1 = arith.constant 1 : index
    %c0_38 = arith.constant 0 : index
    %94 = vector.load %arg10[%c1, %c0_38] : memref<2x32xf32, #tpu.memory_space<vmem>>, vector<1x32xf32>
    %95 = vector.broadcast %80 : vector<8x1xf32> to vector<8x32xf32>
    %96 = vector.broadcast %94 : vector<1x32xf32> to vector<8x32xf32>
    %97 = arith.mulf %95, %96 : vector<8x32xf32>
    %98 = arith.addf %93, %97 : vector<8x32xf32>
    %c0_39 = arith.constant 0 : index
    %c0_40 = arith.constant 0 : index
    %99 = vector.load %arg9[%c0_39, %c0_40] : memref<128x32xf32, #tpu.memory_space<vmem>>, vector<128x32xf32>
    %cst_41 = arith.constant dense<0.000000e+00> : vector<8x32xf32>
    %100 = tpu.matmul %89, %99, %cst_41 {dimension_numbers = #tpu.dot_dimension_numbers<[1], [0], [0], [1], [0, 0, 1, 1], [], []>} : vector<8x128xf32>, vector<128x32xf32>, vector<8x32xf32> -> vector<8x32xf32>
    %101 = arith.addf %100, %98 : vector<8x32xf32>
    %c0_42 = arith.constant 0 : index
    %c0_43 = arith.constant 0 : index
    %102 = vector.load %arg11[%c0_42, %c0_43] : memref<32x32xf32, #tpu.memory_space<vmem>>, vector<32x32xf32>
    %cst_44 = arith.constant dense<0.000000e+00> : vector<8x32xf32>
    %103 = tpu.matmul %101, %102, %cst_44 {dimension_numbers = #tpu.dot_dimension_numbers<[1], [0], [0], [1], [0, 0, 1, 1], [], []>} : vector<8x32xf32>, vector<32x32xf32>, vector<8x32xf32> -> vector<8x32xf32>
    %c0_45 = arith.constant 0 : index
    %c0_46 = arith.constant 0 : index
    %104 = vector.load %arg12[%c0_45, %c0_46] : memref<1x32xf32, #tpu.memory_space<vmem>>, vector<1x32xf32>
    %105 = vector.broadcast %104 : vector<1x32xf32> to vector<8x32xf32>
    %106 = arith.addf %103, %105 : vector<8x32xf32>
    %107 = math.tanh %106 : vector<8x32xf32>
    %108 = arith.addf %101, %107 : vector<8x32xf32>
    %cst_47 = arith.constant 5.000000e-01 : f32
    %109 = vector.broadcast %cst_47 : f32 to vector<8x32xf32>
    %110 = arith.mulf %108, %109 : vector<8x32xf32>
    %cst_48 = arith.constant 0.000000e+00 : f32
    %111 = vector.broadcast %cst_48 : f32 to vector<8x96xf32>
    %112 = tpu.concatenate %110, %111 in 1 : vector<8x32xf32>, vector<8x96xf32> -> vector<8x128xf32>
    %c0_49 = arith.constant 0 : index
    %c0_50 = arith.constant 0 : index
    %c0_51 = arith.constant 0 : index
    %113 = vector.load %arg13[%c0_49, %c0_50, %c0_51] : memref<1x8x128xf32, #tpu.memory_space<vmem>>, vector<1x8x128xf32>
    %114 = vector.shape_cast %113 : vector<1x8x128xf32> to vector<8x128xf32>
    %115 = vector.shape_cast %112 : vector<8x128xf32> to vector<1x8x128xf32>
    tpu.vector_store %arg13[%c0_49, %c0_50, %c0_51], %115 {strides = array<i32>} : memref<1x8x128xf32, #tpu.memory_space<vmem>>, vector<1x8x128xf32>,
    %cst_52 = arith.constant 0.000000e+00 : f32
    %116 = vector.broadcast %cst_52 : f32 to vector<1x115xf32>
    %117 = tpu.concatenate %46, %36, %116 in 1 : vector<1x2xf32>, vector<1x11xf32>, vector<1x115xf32> -> vector<1x128xf32>
    %c0_53 = arith.constant 0 : index
    %c0_54 = arith.constant 0 : index
    %c0_55 = arith.constant 0 : index
    %118 = vector.load %arg14[%c0_53, %c0_54, %c0_55] : memref<1x1x128xf32, #tpu.memory_space<vmem>>, vector<1x1x128xf32>
    %119 = vector.shape_cast %118 : vector<1x1x128xf32> to vector<1x128xf32>
    %120 = vector.shape_cast %117 : vector<1x128xf32> to vector<1x1x128xf32>
    tpu.vector_store %arg14[%c0_53, %c0_54, %c0_55], %120 {strides = array<i32>} : memref<1x1x128xf32, #tpu.memory_space<vmem>>, vector<1x1x128xf32>,
    return
  }
  func.func @transform_0(%arg0: i32) -> (i32, i32, i32) {
    %c0_i32 = arith.constant 0 : i32
    %c0_i32_0 = arith.constant 0 : i32
    %c0_i32_1 = arith.constant 0 : i32
    return %arg0, %c0_i32, %c0_i32_0 : i32, i32, i32
  }
  func.func @transform_1(%arg0: i32) -> (i32, i32, i32) {
    %c0_i32 = arith.constant 0 : i32
    %c0_i32_0 = arith.constant 0 : i32
    %c0_i32_1 = arith.constant 0 : i32
    return %arg0, %c0_i32, %c0_i32_0 : i32, i32, i32
  }
  func.func @transform_2(%arg0: i32) -> (i32, i32) {
    %c0_i32 = arith.constant 0 : i32
    %c0_i32_0 = arith.constant 0 : i32
    %c0_i32_1 = arith.constant 0 : i32
    return %c0_i32, %c0_i32_0 : i32, i32
  }
  func.func @transform_3(%arg0: i32) -> (i32, i32) {
    %c0_i32 = arith.constant 0 : i32
    %c0_i32_0 = arith.constant 0 : i32
    %c0_i32_1 = arith.constant 0 : i32
    return %c0_i32, %c0_i32_0 : i32, i32
  }
  func.func @transform_4(%arg0: i32) -> (i32, i32) {
    %c0_i32 = arith.constant 0 : i32
    %c0_i32_0 = arith.constant 0 : i32
    %c0_i32_1 = arith.constant 0 : i32
    return %c0_i32, %c0_i32_0 : i32, i32
  }
  func.func @transform_5(%arg0: i32) -> (i32, i32) {
    %c0_i32 = arith.constant 0 : i32
    %c0_i32_0 = arith.constant 0 : i32
    %c0_i32_1 = arith.constant 0 : i32
    return %c0_i32, %c0_i32_0 : i32, i32
  }
  func.func @transform_6(%arg0: i32) -> (i32, i32) {
    %c0_i32 = arith.constant 0 : i32
    %c0_i32_0 = arith.constant 0 : i32
    %c0_i32_1 = arith.constant 0 : i32
    return %c0_i32, %c0_i32_0 : i32, i32
  }
  func.func @transform_7(%arg0: i32) -> (i32, i32) {
    %c0_i32 = arith.constant 0 : i32
    %c0_i32_0 = arith.constant 0 : i32
    %c0_i32_1 = arith.constant 0 : i32
    return %c0_i32, %c0_i32_0 : i32, i32
  }
  func.func @transform_8(%arg0: i32) -> (i32, i32) {
    %c0_i32 = arith.constant 0 : i32
    %c0_i32_0 = arith.constant 0 : i32
    %c0_i32_1 = arith.constant 0 : i32
    return %c0_i32, %c0_i32_0 : i32, i32
  }
  func.func @transform_9(%arg0: i32) -> (i32, i32) {
    %c0_i32 = arith.constant 0 : i32
    %c0_i32_0 = arith.constant 0 : i32
    %c0_i32_1 = arith.constant 0 : i32
    return %c0_i32, %c0_i32_0 : i32, i32
  }
  func.func @transform_10(%arg0: i32) -> (i32, i32) {
    %c0_i32 = arith.constant 0 : i32
    %c0_i32_0 = arith.constant 0 : i32
    %c0_i32_1 = arith.constant 0 : i32
    return %c0_i32, %c0_i32_0 : i32, i32
  }
  func.func @transform_11(%arg0: i32) -> (i32, i32) {
    %c0_i32 = arith.constant 0 : i32
    %c0_i32_0 = arith.constant 0 : i32
    %c0_i32_1 = arith.constant 0 : i32
    return %c0_i32, %c0_i32_0 : i32, i32
  }
  func.func @transform_12(%arg0: i32) -> (i32, i32, i32) {
    %c0_i32 = arith.constant 0 : i32
    %c0_i32_0 = arith.constant 0 : i32
    %c0_i32_1 = arith.constant 0 : i32
    return %arg0, %c0_i32, %c0_i32_0 : i32, i32, i32
  }
  func.func @transform_13(%arg0: i32) -> (i32, i32, i32) {
    %c0_i32 = arith.constant 0 : i32
    %c0_i32_0 = arith.constant 0 : i32
    %c0_i32_1 = arith.constant 0 : i32
    return %arg0, %c0_i32, %c0_i32_0 : i32, i32, i32
  }
}

</mosaic_0001>

<llo_original>
// kernel: tpu_custom_call.1
$region0: #{tpu_custom_call.1}
  #allocation0 [shape = 'u32[]', space=smem, size = 0x4, offset = 0x4, fixed_abs, tag = 'smem constant byte address 0x4 - core index']
  #allocation1 [shape = 'u32[144,128]{1,0:T(1,128)}', space=vmem, size = 0x12000, scoped, tag = 'internal scratch']
  %s0 = inlined_call_operand.vmem [shape: f32[2,8,32], index: 0, kind: input, shape index: {}]
  %s1 = inlined_call_operand.vmem [shape: f32[2,1,8], index: 1, kind: input, shape index: {}]
  %s2 = inlined_call_operand.vmem [shape: f32[16,32], index: 2, kind: input, shape index: {}]
  %s3 = inlined_call_operand.vmem [shape: f32[32,16], index: 3, kind: input, shape index: {}]
  %s4 = inlined_call_operand.vmem [shape: f32[64,11], index: 4, kind: input, shape index: {}]
  %s5 = inlined_call_operand.vmem [shape: f32[1,11], index: 5, kind: input, shape index: {}]
  %s6 = inlined_call_operand.vmem [shape: f32[32,128], index: 6, kind: input, shape index: {}]
  %s7 = inlined_call_operand.vmem [shape: f32[1,128], index: 7, kind: input, shape index: {}]
  %s8 = inlined_call_operand.vmem [shape: f32[128,32], index: 8, kind: input, shape index: {}]
  %s9 = inlined_call_operand.vmem [shape: f32[2,32], index: 9, kind: input, shape index: {}]
  %s10 = inlined_call_operand.vmem [shape: f32[32,32], index: 10, kind: input, shape index: {}]
  %s11 = inlined_call_operand.vmem [shape: f32[1,32], index: 11, kind: input, shape index: {}]
  %s12 = inlined_call_operand.hbm [shape: f32[2,8,128], index: 12, kind: output, shape index: {0}]
  %s13 = inlined_call_operand.hbm [shape: f32[2,1,128], index: 13, kind: output, shape index: {1}]
  %14 = xla_tuple %s12, %s13
  %s15 = sld [smem:[#allocation0]]
  $region89: #{tpu_custom_call.1} parent=0
    _
  %s17 = ssub.s32 1, %s15
  %s18 = scalar_select 0, %s17, %s15
  $region1: #{tpu_custom_call.1} parent=0
    #allocation2 [shape = 'u8[8192]{0}', space=vmem, size = 0x2000, scoped, tag = 'output window, operand 0']
    #allocation3 [shape = 's32[2]{0}', space=sflag, size = 0x8, scoped, tag = 'scoped memory for tpu_custom_call.1']
    #allocation4 [shape = 'u8[1024]{0}', space=vmem, size = 0x400, scoped, tag = 'output window, operand 1']
    #allocation5 [shape = 's32[2]{0}', space=sflag, size = 0x8, scoped, tag = 'scoped memory for tpu_custom_call.1']
    %19 = vsyncpa [#allocation3], 0
    %s20 = scalar_lea.sflag [#allocation3], 1
    %21 = vsyncpa %s20, 0
    %22 = vsyncpa [#allocation5], 0
    %s23 = scalar_lea.sflag [#allocation5], 1
    %24 = vsyncpa %s23, 0
    loop: start=0, step=1, limit=4
    $region2: #{tpu_custom_call.1} parent=1 // loop_pre_header
      _
    $region3: #{tpu_custom_call.1} parent=1 // loop_header
      %s26 = sphi 0, %s30
      %p27 = scmp.ge.s32.totalorder %s26, 4
      %s36 = sphi 0, %s38
      %s39 = sphi 0, %s36
      %s40 = sphi 0, %s39
      %s56 = sphi 0, %s40
      %s62 = sphi 0, %s64
      %s65 = sphi 0, %s62
      %s66 = sphi 0, %s65
      %s82 = sphi 0, %s66
      %s86 = sphi 0, %s86
      %s88 = sphi 0, %s86
      %s89 = sphi 0, %s88
      %s103 = sphi 0, %s89
      %s107 = sphi 0, %s107
      %s109 = sphi 0, %s107
      %s110 = sphi 0, %s109
      %s124 = sphi 0, %s110
      %s128 = sphi 0, %s128
      %s130 = sphi 0, %s128
      %s131 = sphi 0, %s130
      %s145 = sphi 0, %s131
      %s149 = sphi 0, %s149
      %s151 = sphi 0, %s149
      %s152 = sphi 0, %s151
      %s166 = sphi 0, %s152
      %s170 = sphi 0, %s170
      %s172 = sphi 0, %s170
      %s173 = sphi 0, %s172
      %s187 = sphi 0, %s173
      %s191 = sphi 0, %s191
      %s193 = sphi 0, %s191
      %s194 = sphi 0, %s193
      %s208 = sphi 0, %s194
      %s212 = sphi 0, %s212
      %s214 = sphi 0, %s212
      %s215 = sphi 0, %s214
      %s229 = sphi 0, %s215
      %s233 = sphi 0, %s233
      %s235 = sphi 0, %s233
      %s236 = sphi 0, %s235
      %s250 = sphi 0, %s236
      %s254 = sphi 0, %s254
      %s256 = sphi 0, %s254
      %s257 = sphi 0, %s256
      %s271 = sphi 0, %s257
      %s275 = sphi 0, %s275
      %s277 = sphi 0, %s275
      %s278 = sphi 0, %s277
      %s292 = sphi 0, %s278
      %s298 = sphi 0, %s300
      %s301 = sphi 0, %s298
      %s302 = sphi 0, %s301
      %s318 = sphi 0, %s302
      %s324 = sphi 0, %s326
      %s327 = sphi 0, %s324
      %s328 = sphi 0, %s327
      %s344 = sphi 0, %s328
    $region4: #{tpu_custom_call.1} parent=1 // loop_header_branch
      %29 = sbr.rel (%p27) target = $region8
    $region5: #{tpu_custom_call.1} parent=1 // loop_body
      %s31 = ssub.s32 %s26, 1
      %s32 = ssub.s32 %s26, 2
      %s33 = sadd.s32 %s26, 1
      %s34 = ssub.s32 %s26, %s33
      %p35 = scmp.eq.s32.totalorder %s34, 0
      %s37 = sadd.s32 %s36, 1
      %s38 = scalar_select %p35, %s36, %s37
      %p41 = pneg %p35
      %p42 = scmp.eq.s32.totalorder %s26, 1
      %p43 = por %p41, %p42
      %p44 = scmp.ne.s32.totalorder %s36, %s39
      %p45 = scmp.eq.s32.totalorder %s26, 0
      %p46 = por %p44, %p45
      %p47 = scmp.ne.s32.totalorder %s36, %s39
      %p48 = scmp.eq.s32.totalorder %s31, 1
      %p49 = por %p47, %p48
      %p50 = scmp.ne.s32.totalorder %s39, %s40
      %p51 = scmp.eq.s32.totalorder %s31, 0
      %p52 = por %p50, %p51
      %p53 = scmp.ne.s32.totalorder %s39, %s40
      %p54 = scmp.eq.s32.totalorder %s32, 1
      %p55 = por %p53, %p54
      %p57 = scmp.ne.s32.totalorder %s40, %s56
      %p58 = scmp.eq.s32.totalorder %s32, 0
      %p59 = por %p57, %p58
      %s60 = ssub.s32 %s26, %s33
      %p61 = scmp.eq.s32.totalorder %s60, 0
      %s63 = sadd.s32 %s62, 1
      %s64 = scalar_select %p61, %s62, %s63
      %p67 = pneg %p61
      %p68 = scmp.eq.s32.totalorder %s26, 1
      %p69 = por %p67, %p68
      %p70 = scmp.ne.s32.totalorder %s62, %s65
      %p71 = scmp.eq.s32.totalorder %s26, 0
      %p72 = por %p70, %p71
      %p73 = scmp.ne.s32.totalorder %s62, %s65
      %p74 = scmp.eq.s32.totalorder %s31, 1
      %p75 = por %p73, %p74
      %p76 = scmp.ne.s32.totalorder %s65, %s66
      %p77 = scmp.eq.s32.totalorder %s31, 0
      %p78 = por %p76, %p77
      %p79 = scmp.ne.s32.totalorder %s65, %s66
      %p80 = scmp.eq.s32.totalorder %s32, 1
      %p81 = por %p79, %p80
      %p83 = scmp.ne.s32.totalorder %s66, %s82
      %p84 = scmp.eq.s32.totalorder %s32, 0
      %p85 = por %p83, %p84
      %s87 = sadd.s32 %s86, 1
      %p90 = scmp.eq.s32.totalorder %s26, 1
      %p91 = scmp.ne.s32.totalorder %s86, %s88
      %p92 = scmp.eq.s32.totalorder %s26, 0
      %p93 = por %p91, %p92
      %p94 = scmp.ne.s32.totalorder %s86, %s88
      %p95 = scmp.eq.s32.totalorder %s31, 1
      %p96 = por %p94, %p95
      %p97 = scmp.ne.s32.totalorder %s88, %s89
      %p98 = scmp.eq.s32.totalorder %s31, 0
      %p99 = por %p97, %p98
      %p100 = scmp.ne.s32.totalorder %s88, %s89
      %p101 = scmp.eq.s32.totalorder %s32, 1
      %p102 = por %p100, %p101
      %p104 = scmp.ne.s32.totalorder %s89, %s103
      %p105 = scmp.eq.s32.totalorder %s32, 0
      %p106 = por %p104, %p105
      %s108 = sadd.s32 %s107, 1
      %p111 = scmp.eq.s32.totalorder %s26, 1
      %p112 = scmp.ne.s32.totalorder %s107, %s109
      %p113 = scmp.eq.s32.totalorder %s26, 0
      %p114 = por %p112, %p113
      %p115 = scmp.ne.s32.totalorder %s107, %s109
      %p116 = scmp.eq.s32.totalorder %s31, 1
      %p117 = por %p115, %p116
      %p118 = scmp.ne.s32.totalorder %s109, %s110
      %p119 = scmp.eq.s32.totalorder %s31, 0
      %p120 = por %p118, %p119
      %p121 = scmp.ne.s32.totalorder %s109, %s110
      %p122 = scmp.eq.s32.totalorder %s32, 1
      %p123 = por %p121, %p122
      %p125 = scmp.ne.s32.totalorder %s110, %s124
      %p126 = scmp.eq.s32.totalorder %s32, 0
      %p127 = por %p125, %p126
      %s129 = sadd.s32 %s128, 1
      %p132 = scmp.eq.s32.totalorder %s26, 1
      %p133 = scmp.ne.s32.totalorder %s128, %s130
      %p134 = scmp.eq.s32.totalorder %s26, 0
      %p135 = por %p133, %p134
      %p136 = scmp.ne.s32.totalorder %s128, %s130
      %p137 = scmp.eq.s32.totalorder %s31, 1
      %p138 = por %p136, %p137
      %p139 = scmp.ne.s32.totalorder %s130, %s131
      %p140 = scmp.eq.s32.totalorder %s31, 0
      %p141 = por %p139, %p140
      %p142 = scmp.ne.s32.totalorder %s130, %s131
      %p143 = scmp.eq.s32.totalorder %s32, 1
      %p144 = por %p142, %p143
      %p146 = scmp.ne.s32.totalorder %s131, %s145
      %p147 = scmp.eq.s32.totalorder %s32, 0
      %p148 = por %p146, %p147
      %s150 = sadd.s32 %s149, 1
      %p153 = scmp.eq.s32.totalorder %s26, 1
      %p154 = scmp.ne.s32.totalorder %s149, %s151
      %p155 = scmp.eq.s32.totalorder %s26, 0
      %p156 = por %p154, %p155
      %p157 = scmp.ne.s32.totalorder %s149, %s151
      %p158 = scmp.eq.s32.totalorder %s31, 1
      %p159 = por %p157, %p158
      %p160 = scmp.ne.s32.totalorder %s151, %s152
      %p161 = scmp.eq.s32.totalorder %s31, 0
      %p162 = por %p160, %p161
      %p163 = scmp.ne.s32.totalorder %s151, %s152
      %p164 = scmp.eq.s32.totalorder %s32, 1
      %p165 = por %p163, %p164
      %p167 = scmp.ne.s32.totalorder %s152, %s166
      %p168 = scmp.eq.s32.totalorder %s32, 0
      %p169 = por %p167, %p168
      %s171 = sadd.s32 %s170, 1
      %p174 = scmp.eq.s32.totalorder %s26, 1
      %p175 = scmp.ne.s32.totalorder %s170, %s172
      %p176 = scmp.eq.s32.totalorder %s26, 0
      %p177 = por %p175, %p176
      %p178 = scmp.ne.s32.totalorder %s170, %s172
      %p179 = scmp.eq.s32.totalorder %s31, 1
      %p180 = por %p178, %p179
      %p181 = scmp.ne.s32.totalorder %s172, %s173
      %p182 = scmp.eq.s32.totalorder %s31, 0
      %p183 = por %p181, %p182
      %p184 = scmp.ne.s32.totalorder %s172, %s173
      %p185 = scmp.eq.s32.totalorder %s32, 1
      %p186 = por %p184, %p185
      %p188 = scmp.ne.s32.totalorder %s173, %s187
      %p189 = scmp.eq.s32.totalorder %s32, 0
      %p190 = por %p188, %p189
      %s192 = sadd.s32 %s191, 1
      %p195 = scmp.eq.s32.totalorder %s26, 1
      %p196 = scmp.ne.s32.totalorder %s191, %s193
      %p197 = scmp.eq.s32.totalorder %s26, 0
      %p198 = por %p196, %p197
      %p199 = scmp.ne.s32.totalorder %s191, %s193
      %p200 = scmp.eq.s32.totalorder %s31, 1
      %p201 = por %p199, %p200
      %p202 = scmp.ne.s32.totalorder %s193, %s194
      %p203 = scmp.eq.s32.totalorder %s31, 0
      %p204 = por %p202, %p203
      %p205 = scmp.ne.s32.totalorder %s193, %s194
      %p206 = scmp.eq.s32.totalorder %s32, 1
      %p207 = por %p205, %p206
      %p209 = scmp.ne.s32.totalorder %s194, %s208
      %p210 = scmp.eq.s32.totalorder %s32, 0
      %p211 = por %p209, %p210
      %s213 = sadd.s32 %s212, 1
      %p216 = scmp.eq.s32.totalorder %s26, 1
      %p217 = scmp.ne.s32.totalorder %s212, %s214
      %p218 = scmp.eq.s32.totalorder %s26, 0
      %p219 = por %p217, %p218
      %p220 = scmp.ne.s32.totalorder %s212, %s214
      %p221 = scmp.eq.s32.totalorder %s31, 1
      %p222 = por %p220, %p221
      %p223 = scmp.ne.s32.totalorder %s214, %s215
      %p224 = scmp.eq.s32.totalorder %s31, 0
      %p225 = por %p223, %p224
      %p226 = scmp.ne.s32.totalorder %s214, %s215
      %p227 = scmp.eq.s32.totalorder %s32, 1
      %p228 = por %p226, %p227
      %p230 = scmp.ne.s32.totalorder %s215, %s229
      %p231 = scmp.eq.s32.totalorder %s32, 0
      %p232 = por %p230, %p231
      %s234 = sadd.s32 %s233, 1
      %p237 = scmp.eq.s32.totalorder %s26, 1
      %p238 = scmp.ne.s32.totalorder %s233, %s235
      %p239 = scmp.eq.s32.totalorder %s26, 0
      %p240 = por %p238, %p239
      %p241 = scmp.ne.s32.totalorder %s233, %s235
      %p242 = scmp.eq.s32.totalorder %s31, 1
      %p243 = por %p241, %p242
      %p244 = scmp.ne.s32.totalorder %s235, %s236
      %p245 = scmp.eq.s32.totalorder %s31, 0
      %p246 = por %p244, %p245
      %p247 = scmp.ne.s32.totalorder %s235, %s236
      %p248 = scmp.eq.s32.totalorder %s32, 1
      %p249 = por %p247, %p248
      %p251 = scmp.ne.s32.totalorder %s236, %s250
      %p252 = scmp.eq.s32.totalorder %s32, 0
      %p253 = por %p251, %p252
      %s255 = sadd.s32 %s254, 1
      %p258 = scmp.eq.s32.totalorder %s26, 1
      %p259 = scmp.ne.s32.totalorder %s254, %s256
      %p260 = scmp.eq.s32.totalorder %s26, 0
      %p261 = por %p259, %p260
      %p262 = scmp.ne.s32.totalorder %s254, %s256
      %p263 = scmp.eq.s32.totalorder %s31, 1
      %p264 = por %p262, %p263
      %p265 = scmp.ne.s32.totalorder %s256, %s257
      %p266 = scmp.eq.s32.totalorder %s31, 0
      %p267 = por %p265, %p266
      %p268 = scmp.ne.s32.totalorder %s256, %s257
      %p269 = scmp.eq.s32.totalorder %s32, 1
      %p270 = por %p268, %p269
      %p272 = scmp.ne.s32.totalorder %s257, %s271
      %p273 = scmp.eq.s32.totalorder %s32, 0
      %p274 = por %p272, %p273
      %s276 = sadd.s32 %s275, 1
      %p279 = scmp.eq.s32.totalorder %s26, 1
      %p280 = scmp.ne.s32.totalorder %s275, %s277
      %p281 = scmp.eq.s32.totalorder %s26, 0
      %p282 = por %p280, %p281
      %p283 = scmp.ne.s32.totalorder %s275, %s277
      %p284 = scmp.eq.s32.totalorder %s31, 1
      %p285 = por %p283, %p284
      %p286 = scmp.ne.s32.totalorder %s277, %s278
      %p287 = scmp.eq.s32.totalorder %s31, 0
      %p288 = por %p286, %p287
      %p289 = scmp.ne.s32.totalorder %s277, %s278
      %p290 = scmp.eq.s32.totalorder %s32, 1
      %p291 = por %p289, %p290
      %p293 = scmp.ne.s32.totalorder %s278, %s292
      %p294 = scmp.eq.s32.totalorder %s32, 0
      %p295 = por %p293, %p294
      %s296 = ssub.s32 %s26, %s33
      %p297 = scmp.eq.s32.totalorder %s296, 0
      %s299 = sadd.s32 %s298, 1
      %s300 = scalar_select %p297, %s298, %s299
      %p303 = pneg %p297
      %p304 = scmp.eq.s32.totalorder %s26, 1
      %p305 = por %p303, %p304
      %p306 = scmp.ne.s32.totalorder %s298, %s301
      %p307 = scmp.eq.s32.totalorder %s26, 0
      %p308 = por %p306, %p307
      %p309 = scmp.ne.s32.totalorder %s298, %s301
      %p310 = scmp.eq.s32.totalorder %s31, 1
      %p311 = por %p309, %p310
      %p312 = scmp.ne.s32.totalorder %s301, %s302
      %p313 = scmp.eq.s32.totalorder %s31, 0
      %p314 = por %p312, %p313
      %p315 = scmp.ne.s32.totalorder %s301, %s302
      %p316 = scmp.eq.s32.totalorder %s32, 1
      %p317 = por %p315, %p316
      %p319 = scmp.ne.s32.totalorder %s302, %s318
      %p320 = scmp.eq.s32.totalorder %s32, 0
      %p321 = por %p319, %p320
      %s322 = ssub.s32 %s26, %s33
      %p323 = scmp.eq.s32.totalorder %s322, 0
      %s325 = sadd.s32 %s324, 1
      %s326 = scalar_select %p323, %s324, %s325
      %p329 = pneg %p323
      %p330 = scmp.eq.s32.totalorder %s26, 1
      %p331 = por %p329, %p330
      %p332 = scmp.ne.s32.totalorder %s324, %s327
      %p333 = scmp.eq.s32.totalorder %s26, 0
      %p334 = por %p332, %p333
      %p335 = scmp.ne.s32.totalorder %s324, %s327
      %p336 = scmp.eq.s32.totalorder %s31, 1
      %p337 = por %p335, %p336
      %p338 = scmp.ne.s32.totalorder %s327, %s328
      %p339 = scmp.eq.s32.totalorder %s31, 0
      %p340 = por %p338, %p339
      %p341 = scmp.ne.s32.totalorder %s327, %s328
      %p342 = scmp.eq.s32.totalorder %s32, 1
      %p343 = por %p341, %p342
      %p345 = scmp.ne.s32.totalorder %s328, %s344
      %p346 = scmp.eq.s32.totalorder %s32, 0
      %p347 = por %p345, %p346
      %p348 = scmp.le.s32.totalorder 1, %s26
      %p349 = scmp.lt.s32.totalorder %s26, 3
      %p350 = pnand %p348, %p349
      %p351 = pneg %p350
      // Predicated region
      $region9: #{tpu_custom_call.1} parent=5 // pred_check
        _
      $region10: #{tpu_custom_call.1} parent=5 // pred_check_branch
        %353 = sbr.rel (%p350) target = $region12
      $region11: #{tpu_custom_call.1} parent=5 // pred_region
        %s354 = ssub.s32 %s26, 1
        // Predicated region
        $region13: #{tpu_custom_call.1} parent=11 // pred_check
          %p355 = pneg %p99
        $region14: #{tpu_custom_call.1} parent=11 // pred_check_branch
          %357 = sbr.rel (%p355) target = $region16
        $region15: #{tpu_custom_call.1} parent=11 // pred_region
          _
        $region16: #{tpu_custom_call.1} parent=11 // pred_fallthru
          _
        // Predicated region
        $region17: #{tpu_custom_call.1} parent=11 // pred_check
          %p358 = pneg %p120
        $region18: #{tpu_custom_call.1} parent=11 // pred_check_branch
          %360 = sbr.rel (%p358) target = $region20
        $region19: #{tpu_custom_call.1} parent=11 // pred_region
          _
        $region20: #{tpu_custom_call.1} parent=11 // pred_fallthru
          _
        // Predicated region
        $region21: #{tpu_custom_call.1} parent=11 // pred_check
          %p361 = pneg %p141
        $region22: #{tpu_custom_call.1} parent=11 // pred_check_branch
          %363 = sbr.rel (%p361) target = $region24
        $region23: #{tpu_custom_call.1} parent=11 // pred_region
          _
        $region24: #{tpu_custom_call.1} parent=11 // pred_fallthru
          _
        // Predicated region
        $region25: #{tpu_custom_call.1} parent=11 // pred_check
          %p364 = pneg %p162
        $region26: #{tpu_custom_call.1} parent=11 // pred_check_branch
          %366 = sbr.rel (%p364) target = $region28
        $region27: #{tpu_custom_call.1} parent=11 // pred_region
          _
        $region28: #{tpu_custom_call.1} parent=11 // pred_fallthru
          _
        // Predicated region
        $region29: #{tpu_custom_call.1} parent=11 // pred_check
          %p367 = pneg %p183
        $region30: #{tpu_custom_call.1} parent=11 // pred_check_branch
          %369 = sbr.rel (%p367) target = $region32
        $region31: #{tpu_custom_call.1} parent=11 // pred_region
          _
        $region32: #{tpu_custom_call.1} parent=11 // pred_fallthru
          _
        // Predicated region
        $region33: #{tpu_custom_call.1} parent=11 // pred_check
          %p370 = pneg %p204
        $region34: #{tpu_custom_call.1} parent=11 // pred_check_branch
          %372 = sbr.rel (%p370) target = $region36
        $region35: #{tpu_custom_call.1} parent=11 // pred_region
          _
        $region36: #{tpu_custom_call.1} parent=11 // pred_fallthru
          _
        // Predicated region
        $region37: #{tpu_custom_call.1} parent=11 // pred_check
          %p373 = pneg %p225
        $region38: #{tpu_custom_call.1} parent=11 // pred_check_branch
          %375 = sbr.rel (%p373) target = $region40
        $region39: #{tpu_custom_call.1} parent=11 // pred_region
          _
        $region40: #{tpu_custom_call.1} parent=11 // pred_fallthru
          _
        // Predicated region
        $region41: #{tpu_custom_call.1} parent=11 // pred_check
          %p376 = pneg %p246
        $region42: #{tpu_custom_call.1} parent=11 // pred_check_branch
          %378 = sbr.rel (%p376) target = $region44
        $region43: #{tpu_custom_call.1} parent=11 // pred_region
          _
        $region44: #{tpu_custom_call.1} parent=11 // pred_fallthru
          _
        // Predicated region
        $region45: #{tpu_custom_call.1} parent=11 // pred_check
          %p379 = pneg %p267
        $region46: #{tpu_custom_call.1} parent=11 // pred_check_branch
          %381 = sbr.rel (%p379) target = $region48
        $region47: #{tpu_custom_call.1} parent=11 // pred_region
          _
        $region48: #{tpu_custom_call.1} parent=11 // pred_fallthru
          _
        // Predicated region
        $region49: #{tpu_custom_call.1} parent=11 // pred_check
          %p382 = pneg %p288
        $region50: #{tpu_custom_call.1} parent=11 // pred_check_branch
          %384 = sbr.rel (%p382) target = $region52
        $region51: #{tpu_custom_call.1} parent=11 // pred_region
          _
        $region52: #{tpu_custom_call.1} parent=11 // pred_fallthru
          _
      $region12: #{tpu_custom_call.1} parent=5 // pred_fallthru
        _
      %p385 = scmp.lt.s32.totalorder %s26, 2
      // Predicated region
      $region53: #{tpu_custom_call.1} parent=5 // pred_check
        %p386 = pneg %p385
      $region54: #{tpu_custom_call.1} parent=5 // pred_check_branch
        %388 = sbr.rel (%p386) target = $region56
      $region55: #{tpu_custom_call.1} parent=5 // pred_region
        // Predicated region
        $region57: #{tpu_custom_call.1} parent=55 // pred_check
          %p389 = pneg %p46
        $region58: #{tpu_custom_call.1} parent=55 // pred_check_branch
          %391 = sbr.rel (%p389) target = $region60
        $region59: #{tpu_custom_call.1} parent=55 // pred_region
          %p392 = scmp.lt.s32.totalorder %s26, 1
          %s393 = scalar_select %p392, %s26, 1
          %s394 = smul.addr %s393, 8
          %s395 = scalar_lea.vmem %s0, %s394
        $region60: #{tpu_custom_call.1} parent=55 // pred_fallthru
          _
        // Predicated region
        $region61: #{tpu_custom_call.1} parent=55 // pred_check
          %p396 = pneg %p72
        $region62: #{tpu_custom_call.1} parent=55 // pred_check_branch
          %398 = sbr.rel (%p396) target = $region64
        $region63: #{tpu_custom_call.1} parent=55 // pred_region
          %p399 = scmp.lt.s32.totalorder %s26, 1
          %s400 = scalar_select %p399, %s26, 1
          %s401 = scalar_lea.vmem %s1, %s400
        $region64: #{tpu_custom_call.1} parent=55 // pred_fallthru
          _
      $region56: #{tpu_custom_call.1} parent=5 // pred_fallthru
        _
      %p402 = scmp.le.s32.totalorder 1, %s26
      %p403 = scmp.lt.s32.totalorder %s26, 3
      %p404 = pnand %p402, %p403
      %p405 = pneg %p404
      // Predicated region
      $region65: #{tpu_custom_call.1} parent=5 // pred_check
        _
      $region66: #{tpu_custom_call.1} parent=5 // pred_check_branch
        %407 = sbr.rel (%p404) target = $region68
      $region67: #{tpu_custom_call.1} parent=5 // pred_region
        %s408 = ssub.s32 %s26, 1
        %p409 = scmp.lt.s32.totalorder %s31, 1
        %s410 = scalar_select %p409, %s31, 1
        %s411 = smul.addr %s410, 8
        %s412 = scalar_lea.vmem %s0, %s411
        %p413 = pneg %p52
        %p414 = pneg %p49
        %p415 = scmp.lt.s32.totalorder %s31, 1
        %s416 = scalar_select %p415, %s31, 1
        %s417 = scalar_lea.vmem %s1, %s416
        %p418 = pneg %p78
        %p419 = pneg %p75
        %p420 = pneg %p99
        %p421 = pneg %p96
        %p422 = pneg %p120
        %p423 = pneg %p117
        %p424 = pneg %p141
        %p425 = pneg %p138
        %p426 = pneg %p162
        %p427 = pneg %p159
        %p428 = pneg %p183
        %p429 = pneg %p180
        %p430 = pneg %p204
        %p431 = pneg %p201
        %p432 = pneg %p225
        %p433 = pneg %p222
        %p434 = pneg %p246
        %p435 = pneg %p243
        %p436 = pneg %p267
        %p437 = pneg %p264
        %p438 = pneg %p288
        %p439 = pneg %p285
        %p440 = pneg %p314
        %p441 = pneg %p311
        %s442 = sand.u32 %s301, 1
        %s443 = scalar_lea.sflag [#allocation3], %s442
        %s444 = sand.u32 %s301, 1
        %s445 = smul.addr %s444, 8
        %s446 = scalar_lea.vmem [#allocation2], %s445
        %p447 = pneg %p340
        %p448 = pneg %p337
        %s449 = sand.u32 %s327, 1
        %s450 = scalar_lea.sflag [#allocation5], %s449
        %s451 = sand.u32 %s327, 1
        %s452 = scalar_lea.vmem [#allocation4], %s451
        %p453 = scmp.lt.s32.totalorder %s31, 1
        %s454 = scalar_select %p453, %s31, 1
        %s455 = smul.addr %s454, 8
        %s456 = scalar_lea.vmem %s0, %s455
        %p457 = scmp.lt.s32.totalorder %s31, 1
        %s458 = scalar_select %p457, %s31, 1
        %s459 = scalar_lea.vmem %s1, %s458
        %v460 = vld [vmem:[%s456] sm:$0xff]
        %v461 = vld [vmem:[%s459] sm:$0x1]
        %v462 = vld [vmem:[%s2] sm:$0xff]
        %v463 = vld [vmem:[%s2 + $0x8] sm:$0xff]
        %v464 = vld [vmem:[%s3] sm:$0xff]
        %v465 = vld [vmem:[%s3 + $0x8] sm:$0xff]
        %v466 = vld [vmem:[%s3 + $0x10] sm:$0xff]
        %v467 = vld [vmem:[%s3 + $0x18] sm:$0xff]
        %vm468 = vcmask 261120
        %v470 = vsel %vm468, %v460, 0
        %472 = vmatprep.subr.mxu0 0.0
        %473 = vmatpush1.msra.mxu0 %v464
        %474 = vmatprep.subr.mxu0 0.0
        %475 = vmatpush1.msra.mxu0 %v465
        %476 = vmatprep.subr.mxu0 0.0
        %477 = vmatpush1.msra.mxu0 %v466
        %478 = vmatprep.subr.mxu0 0.0
        %479 = vmatpush1.msra.mxu0 %v467
        %480 = vmatprep.subr.mxu0 0.0
        %481 = vmatpush1.msra.mxu0 0.0
        %482 = vmatprep.subr.mxu0 0.0
        %483 = vmatpush1.msra.mxu0 0.0
        %484 = vmatprep.subr.mxu0 0.0
        %485 = vmatpush1.msra.mxu0 0.0
        %486 = vmatprep.subr.mxu0 0.0
        %487 = vmatpush1.msra.mxu0 0.0
        %488 = vmatprep.subr.mxu0 0.0
        %489 = vmatpush1.msra.mxu0 0.0
        %490 = vmatprep.subr.mxu0 0.0
        %491 = vmatpush1.msra.mxu0 0.0
        %492 = vmatprep.subr.mxu0 0.0
        %493 = vmatpush1.msra.mxu0 0.0
        %494 = vmatprep.subr.mxu0 0.0
        %495 = vmatpush1.msra.mxu0 0.0
        %496 = vmatprep.subr.mxu0 0.0
        %497 = vmatpush1.msra.mxu0 0.0
        %498 = vmatprep.subr.mxu0 0.0
        %499 = vmatpush1.msra.mxu0 0.0
        %500 = vmatprep.subr.mxu0 0.0
        %501 = vmatpush1.msra.mxu0 0.0
        %502 = vmatprep.subr.mxu0 0.0
        %503 = vmatpush1.msra.mxu0 0.0
        %504 = vmatprep.subr.mxu0 0.0
        %505 = vmatpush1.msra.mxu0 0.0
        %506 = vmatprep.subr.mxu0 0.0
        %507 = vmatpush1.msra.mxu0 0.0
        %508 = vmatprep.subr.mxu0 0.0
        %509 = vmatpush1.msra.mxu0 0.0
        %510 = vmatprep.subr.mxu0 0.0
        %511 = vmatpush1.msra.mxu0 0.0
        %512 = vmatprep.subr.mxu0 0.0
        %513 = vmatpush1.msra.mxu0 0.0
        %514 = vmatprep.subr.mxu0 0.0
        %515 = vmatpush1.msra.mxu0 0.0
        %516 = vmatprep.subr.mxu0 0.0
        %517 = vmatpush1.msra.mxu0 0.0
        %518 = vmatprep.subr.mxu0 0.0
        %519 = vmatpush1.msra.mxu0 0.0
        %520 = vmatprep.subr.mxu0 0.0
        %521 = vmatpush1.msra.mxu0 0.0
        %522 = vmatprep.subr.mxu0 0.0
        %523 = vmatpush1.msra.mxu0 0.0
        %524 = vmatprep.subr.mxu0 0.0
        %525 = vmatpush1.msra.mxu0 0.0
        %526 = vmatprep.subr.mxu0 0.0
        %527 = vmatpush1.msra.mxu0 0.0
        %528 = vmatprep.subr.mxu0 0.0
        %529 = vmatpush1.msra.mxu0 0.0
        %530 = vmatprep.subr.mxu0 0.0
        %531 = vmatpush1.msra.mxu0 0.0
        %532 = vmatprep.subr.mxu0 0.0
        %533 = vmatpush1.msra.mxu0 0.0
        %534 = vmatprep.subr.mxu0 0.0
        %535 = vmatpush1.msra.mxu0 0.0
        %536 = vmatprep.mubr.f32.mxu0 0.0
        %537 = vmatmul.mubr.f32.gmra.mrb[0].mxu0 %v470
        %v538 = vpop.f32.mrb[0].mxu0
        %v539 = vadd.f32 0.0, %v538
        %v540 = vpop.f32.mrb[0].mxu0
        %541 = vdwg.mxu0
        %v542 = vmul.f32 %v539, 0.17677669
        %vm543 = vcmask 130048
        %v544 = vsel %vm543, %v542, -inf
        %545 = vmax.xlane.f32.xlu0 %v544
        %v546 = vpop.xlane.xlu0 %545
        %v547 = vsub.f32 %v542, %v546
        %v548 = vmul.f32 %v547, 1.442695
        %v549 = vpow.pop %v548
        %v550 = vsel %vm543, %v549, 0.0
        %551 = vadd.xlane.f32.xlu0 %v550
        %v552 = vpop.xlane.xlu0 %551
        %v553 = vrcp.pop %v552
        %v554 = vmul.f32 %v549, %v553
        %v556 = vsel %vm543, %v554, 0
        %558 = vmatprep.subr.mxu0 0.0
        %559 = vmatpush1.msra.mxu0 %v462
        %560 = vmatprep.subr.mxu0 0.0
        %561 = vmatpush1.msra.mxu0 %v463
        %562 = vmatprep.subr.mxu0 0.0
        %563 = vmatpush1.msra.mxu0 0.0
        %564 = vmatprep.subr.mxu0 0.0
        %565 = vmatpush1.msra.mxu0 0.0
        %566 = vmatprep.subr.mxu0 0.0
        %567 = vmatpush1.msra.mxu0 0.0
        %568 = vmatprep.subr.mxu0 0.0
        %569 = vmatpush1.msra.mxu0 0.0
        %570 = vmatprep.subr.mxu0 0.0
        %571 = vmatpush1.msra.mxu0 0.0
        %572 = vmatprep.subr.mxu0 0.0
        %573 = vmatpush1.msra.mxu0 0.0
        %574 = vmatprep.subr.mxu0 0.0
        %575 = vmatpush1.msra.mxu0 0.0
        %576 = vmatprep.subr.mxu0 0.0
        %577 = vmatpush1.msra.mxu0 0.0
        %578 = vmatprep.subr.mxu0 0.0
        %579 = vmatpush1.msra.mxu0 0.0
        %580 = vmatprep.subr.mxu0 0.0
        %581 = vmatpush1.msra.mxu0 0.0
        %582 = vmatprep.subr.mxu0 0.0
        %583 = vmatpush1.msra.mxu0 0.0
        %584 = vmatprep.subr.mxu0 0.0
        %585 = vmatpush1.msra.mxu0 0.0
        %586 = vmatprep.subr.mxu0 0.0
        %587 = vmatpush1.msra.mxu0 0.0
        %588 = vmatprep.subr.mxu0 0.0
        %589 = vmatpush1.msra.mxu0 0.0
        %590 = vmatprep.subr.mxu0 0.0
        %591 = vmatpush1.msra.mxu0 0.0
        %592 = vmatprep.subr.mxu0 0.0
        %593 = vmatpush1.msra.mxu0 0.0
        %594 = vmatprep.subr.mxu0 0.0
        %595 = vmatpush1.msra.mxu0 0.0
        %596 = vmatprep.subr.mxu0 0.0
        %597 = vmatpush1.msra.mxu0 0.0
        %598 = vmatprep.subr.mxu0 0.0
        %599 = vmatpush1.msra.mxu0 0.0
        %600 = vmatprep.subr.mxu0 0.0
        %601 = vmatpush1.msra.mxu0 0.0
        %602 = vmatprep.subr.mxu0 0.0
        %603 = vmatpush1.msra.mxu0 0.0
        %604 = vmatprep.subr.mxu0 0.0
        %605 = vmatpush1.msra.mxu0 0.0
        %606 = vmatprep.subr.mxu0 0.0
        %607 = vmatpush1.msra.mxu0 0.0
        %608 = vmatprep.subr.mxu0 0.0
        %609 = vmatpush1.msra.mxu0 0.0
        %610 = vmatprep.subr.mxu0 0.0
        %611 = vmatpush1.msra.mxu0 0.0
        %612 = vmatprep.subr.mxu0 0.0
        %613 = vmatpush1.msra.mxu0 0.0
        %614 = vmatprep.subr.mxu0 0.0
        %615 = vmatpush1.msra.mxu0 0.0
        %616 = vmatprep.subr.mxu0 0.0
        %617 = vmatpush1.msra.mxu0 0.0
        %618 = vmatprep.subr.mxu0 0.0
        %619 = vmatpush1.msra.mxu0 0.0
        %620 = vmatprep.subr.mxu0 0.0
        %621 = vmatpush1.msra.mxu0 0.0
        %622 = vmatprep.mubr.f32.mxu0 0.0
        %623 = vmatmul.mubr.f32.gmra.mrb[0].mxu0 %v556
        %v624 = vpop.f32.mrb[0].mxu0
        %v625 = vadd.f32 0.0, %v624
        %v626 = vpop.f32.mrb[0].mxu0
        %627 = vdwg.mxu0
        %v628 = vmul.f32 %v625, 0.2
        %v629 = vadd.f32 %v460, %v628
        %vm630 = vcmask 57344
        %v631 = vsel %vm630, %v461, 0.0
        %632 = vadd.xlane.f32.xlu0 %v631
        %v633 = vpop.xlane.xlu0 %632
        %v634 = vmax.f32 %v633, 1.0
        %v635 = vrcp.pop %v634
        %v636 = vmul.f32 1.0, %v635
        %637 = vrot.lane.b32.xlu0 %v460, 32
        %v638 = vpop.permute.xlu0 %637
        %v640 = vsel %vm468, %v629, %v638
        %vm641 = vcmask 64512
        %v643 = vsel %vm641, %v461, 0
        %645 = vmatprep.subr.mxu0 0.0
        %646 = vmatpush1.msra.mxu0 %v640
        %647 = vmatprep.subr.mxu0 0.0
        %648 = vmatpush1.msra.mxu0 0.0
        %649 = vmatprep.subr.mxu0 0.0
        %650 = vmatpush1.msra.mxu0 0.0
        %651 = vmatprep.subr.mxu0 0.0
        %652 = vmatpush1.msra.mxu0 0.0
        %653 = vmatprep.subr.mxu0 0.0
        %654 = vmatpush1.msra.mxu0 0.0
        %655 = vmatprep.subr.mxu0 0.0
        %656 = vmatpush1.msra.mxu0 0.0
        %657 = vmatprep.subr.mxu0 0.0
        %658 = vmatpush1.msra.mxu0 0.0
        %659 = vmatprep.subr.mxu0 0.0
        %660 = vmatpush1.msra.mxu0 0.0
        %661 = vmatprep.subr.mxu0 0.0
        %662 = vmatpush1.msra.mxu0 0.0
        %663 = vmatprep.subr.mxu0 0.0
        %664 = vmatpush1.msra.mxu0 0.0
        %665 = vmatprep.subr.mxu0 0.0
        %666 = vmatpush1.msra.mxu0 0.0
        %667 = vmatprep.subr.mxu0 0.0
        %668 = vmatpush1.msra.mxu0 0.0
        %669 = vmatprep.subr.mxu0 0.0
        %670 = vmatpush1.msra.mxu0 0.0
        %671 = vmatprep.subr.mxu0 0.0
        %672 = vmatpush1.msra.mxu0 0.0
        %673 = vmatprep.subr.mxu0 0.0
        %674 = vmatpush1.msra.mxu0 0.0
        %675 = vmatprep.subr.mxu0 0.0
        %676 = vmatpush1.msra.mxu0 0.0
        %677 = vmatprep.subr.mxu0 0.0
        %678 = vmatpush1.msra.mxu0 0.0
        %679 = vmatprep.subr.mxu0 0.0
        %680 = vmatpush1.msra.mxu0 0.0
        %681 = vmatprep.subr.mxu0 0.0
        %682 = vmatpush1.msra.mxu0 0.0
        %683 = vmatprep.subr.mxu0 0.0
        %684 = vmatpush1.msra.mxu0 0.0
        %685 = vmatprep.subr.mxu0 0.0
        %686 = vmatpush1.msra.mxu0 0.0
        %687 = vmatprep.subr.mxu0 0.0
        %688 = vmatpush1.msra.mxu0 0.0
        %689 = vmatprep.subr.mxu0 0.0
        %690 = vmatpush1.msra.mxu0 0.0
        %691 = vmatprep.subr.mxu0 0.0
        %692 = vmatpush1.msra.mxu0 0.0
        %693 = vmatprep.subr.mxu0 0.0
        %694 = vmatpush1.msra.mxu0 0.0
        %695 = vmatprep.subr.mxu0 0.0
        %696 = vmatpush1.msra.mxu0 0.0
        %697 = vmatprep.subr.mxu0 0.0
        %698 = vmatpush1.msra.mxu0 0.0
        %699 = vmatprep.subr.mxu0 0.0
        %700 = vmatpush1.msra.mxu0 0.0
        %701 = vmatprep.subr.mxu0 0.0
        %702 = vmatpush1.msra.mxu0 0.0
        %703 = vmatprep.subr.mxu0 0.0
        %704 = vmatpush1.msra.mxu0 0.0
        %705 = vmatprep.subr.mxu0 0.0
        %706 = vmatpush1.msra.mxu0 0.0
        %707 = vmatprep.subr.mxu0 0.0
        %708 = vmatpush1.msra.mxu0 0.0
        %709 = vmatprep.mubr.f32.mxu0 0.0
        %710 = vmatmul.mubr.f32.gmra.mrb[0].mxu0 %v643
        %v711 = vpop.f32.mrb[0].mxu0
        %v712 = vadd.f32 0.0, %v711
        %v713 = vpop.f32.mrb[0].mxu0
        %714 = vdwg.mxu0
        %v715 = vmul.f32 %v712, %v636
        %v716 = vld [vmem:[%s4] sm:$0xff]
        %v717 = vld [vmem:[%s4 + $0x8] sm:$0xff]
        %v718 = vld [vmem:[%s4 + $0x10] sm:$0xff]
        %v719 = vld [vmem:[%s4 + $0x18] sm:$0xff]
        %v720 = vld [vmem:[%s4 + $0x20] sm:$0xff]
        %v721 = vld [vmem:[%s4 + $0x28] sm:$0xff]
        %v722 = vld [vmem:[%s4 + $0x30] sm:$0xff]
        %v723 = vld [vmem:[%s4 + $0x38] sm:$0xff]
        %v724 = vld [vmem:[%s5] sm:$0x1]
        %vm725 = vcmask 523264
        %v727 = vsel %vm725, %v715, 0
        %729 = vmatprep.subr.mxu0 0.0
        %730 = vmatpush1.msra.mxu0 %v716
        %731 = vmatprep.subr.mxu0 0.0
        %732 = vmatpush1.msra.mxu0 %v717
        %733 = vmatprep.subr.mxu0 0.0
        %734 = vmatpush1.msra.mxu0 %v718
        %735 = vmatprep.subr.mxu0 0.0
        %736 = vmatpush1.msra.mxu0 %v719
        %737 = vmatprep.subr.mxu0 0.0
        %738 = vmatpush1.msra.mxu0 %v720
        %739 = vmatprep.subr.mxu0 0.0
        %740 = vmatpush1.msra.mxu0 %v721
        %741 = vmatprep.subr.mxu0 0.0
        %742 = vmatpush1.msra.mxu0 %v722
        %743 = vmatprep.subr.mxu0 0.0
        %744 = vmatpush1.msra.mxu0 %v723
        %745 = vmatprep.subr.mxu0 0.0
        %746 = vmatpush1.msra.mxu0 0.0
        %747 = vmatprep.subr.mxu0 0.0
        %748 = vmatpush1.msra.mxu0 0.0
        %749 = vmatprep.subr.mxu0 0.0
        %750 = vmatpush1.msra.mxu0 0.0
        %751 = vmatprep.subr.mxu0 0.0
        %752 = vmatpush1.msra.mxu0 0.0
        %753 = vmatprep.subr.mxu0 0.0
        %754 = vmatpush1.msra.mxu0 0.0
        %755 = vmatprep.subr.mxu0 0.0
        %756 = vmatpush1.msra.mxu0 0.0
        %757 = vmatprep.subr.mxu0 0.0
        %758 = vmatpush1.msra.mxu0 0.0
        %759 = vmatprep.subr.mxu0 0.0
        %760 = vmatpush1.msra.mxu0 0.0
        %761 = vmatprep.subr.mxu0 0.0
        %762 = vmatpush1.msra.mxu0 0.0
        %763 = vmatprep.subr.mxu0 0.0
        %764 = vmatpush1.msra.mxu0 0.0
        %765 = vmatprep.subr.mxu0 0.0
        %766 = vmatpush1.msra.mxu0 0.0
        %767 = vmatprep.subr.mxu0 0.0
        %768 = vmatpush1.msra.mxu0 0.0
        %769 = vmatprep.subr.mxu0 0.0
        %770 = vmatpush1.msra.mxu0 0.0
        %771 = vmatprep.subr.mxu0 0.0
        %772 = vmatpush1.msra.mxu0 0.0
        %773 = vmatprep.subr.mxu0 0.0
        %774 = vmatpush1.msra.mxu0 0.0
        %775 = vmatprep.subr.mxu0 0.0
        %776 = vmatpush1.msra.mxu0 0.0
        %777 = vmatprep.subr.mxu0 0.0
        %778 = vmatpush1.msra.mxu0 0.0
        %779 = vmatprep.subr.mxu0 0.0
        %780 = vmatpush1.msra.mxu0 0.0
        %781 = vmatprep.subr.mxu0 0.0
        %782 = vmatpush1.msra.mxu0 0.0
        %783 = vmatprep.subr.mxu0 0.0
        %784 = vmatpush1.msra.mxu0 0.0
        %785 = vmatprep.subr.mxu0 0.0
        %786 = vmatpush1.msra.mxu0 0.0
        %787 = vmatprep.subr.mxu0 0.0
        %788 = vmatpush1.msra.mxu0 0.0
        %789 = vmatprep.subr.mxu0 0.0
        %790 = vmatpush1.msra.mxu0 0.0
        %791 = vmatprep.subr.mxu0 0.0
        %792 = vmatpush1.msra.mxu0 0.0
        %793 = vmatprep.mubr.f32.mxu0 0.0
        %794 = vmatmul.mubr.f32.gmra.mrb[0].mxu0 %v727
        %v795 = vpop.f32.mrb[0].mxu0
        %v796 = vadd.f32 %v724, %v795
        %v797 = vpop.f32.mrb[0].mxu0
        %798 = vdwg.mxu0
        %vm799 = vcmask 8192
        %v800 = vsel %vm799, %v796, -inf
        %801 = vmax.xlane.f32.xlu0 %v800
        %v802 = vpop.xlane.xlu0 %801
        %v803 = vsub.f32 %v796, %v802
        %v804 = vmul.f32 %v803, 1.442695
        %v805 = vpow.pop %v804
        %v806 = vsel %vm799, %v805, 0.0
        %807 = vadd.xlane.f32.xlu0 %v806
        %v808 = vpop.xlane.xlu0 %807
        %v809 = vrcp.pop %v808
        %v810 = vmul.f32 %v805, %v809
        %v811 = vld [vmem:[%s6] sm:$0xff]
        %v812 = vld [vmem:[%s6 + $0x8] sm:$0xff]
        %v813 = vld [vmem:[%s6 + $0x10] sm:$0xff]
        %v814 = vld [vmem:[%s6 + $0x18] sm:$0xff]
        %v815 = vld [vmem:[%s7] sm:$0x1]
        %v817 = vlaneseq
        %v818 = vshrl.u32 %v817, 7
        %v819 = vsub.s32 0, %v818
        %v820 = vrot.slane %v815, %v819
        %822 = vmatprep.subr.mxu0 0.0
        %823 = vmatpush1.msra.mxu0 %v811
        %824 = vmatprep.subr.mxu0 0.0
        %825 = vmatpush1.msra.mxu0 %v812
        %826 = vmatprep.subr.mxu0 0.0
        %827 = vmatpush1.msra.mxu0 %v813
        %828 = vmatprep.subr.mxu0 0.0
        %829 = vmatpush1.msra.mxu0 %v814
        %830 = vmatprep.subr.mxu0 0.0
        %831 = vmatpush1.msra.mxu0 0.0
        %832 = vmatprep.subr.mxu0 0.0
        %833 = vmatpush1.msra.mxu0 0.0
        %834 = vmatprep.subr.mxu0 0.0
        %835 = vmatpush1.msra.mxu0 0.0
        %836 = vmatprep.subr.mxu0 0.0
        %837 = vmatpush1.msra.mxu0 0.0
        %838 = vmatprep.subr.mxu0 0.0
        %839 = vmatpush1.msra.mxu0 0.0
        %840 = vmatprep.subr.mxu0 0.0
        %841 = vmatpush1.msra.mxu0 0.0
        %842 = vmatprep.subr.mxu0 0.0
        %843 = vmatpush1.msra.mxu0 0.0
        %844 = vmatprep.subr.mxu0 0.0
        %845 = vmatpush1.msra.mxu0 0.0
        %846 = vmatprep.subr.mxu0 0.0
        %847 = vmatpush1.msra.mxu0 0.0
        %848 = vmatprep.subr.mxu0 0.0
        %849 = vmatpush1.msra.mxu0 0.0
        %850 = vmatprep.subr.mxu0 0.0
        %851 = vmatpush1.msra.mxu0 0.0
        %852 = vmatprep.subr.mxu0 0.0
        %853 = vmatpush1.msra.mxu0 0.0
        %854 = vmatprep.subr.mxu0 0.0
        %855 = vmatpush1.msra.mxu0 0.0
        %856 = vmatprep.subr.mxu0 0.0
        %857 = vmatpush1.msra.mxu0 0.0
        %858 = vmatprep.subr.mxu0 0.0
        %859 = vmatpush1.msra.mxu0 0.0
        %860 = vmatprep.subr.mxu0 0.0
        %861 = vmatpush1.msra.mxu0 0.0
        %862 = vmatprep.subr.mxu0 0.0
        %863 = vmatpush1.msra.mxu0 0.0
        %864 = vmatprep.subr.mxu0 0.0
        %865 = vmatpush1.msra.mxu0 0.0
        %866 = vmatprep.subr.mxu0 0.0
        %867 = vmatpush1.msra.mxu0 0.0
        %868 = vmatprep.subr.mxu0 0.0
        %869 = vmatpush1.msra.mxu0 0.0
        %870 = vmatprep.subr.mxu0 0.0
        %871 = vmatpush1.msra.mxu0 0.0
        %872 = vmatprep.subr.mxu0 0.0
        %873 = vmatpush1.msra.mxu0 0.0
        %874 = vmatprep.subr.mxu0 0.0
        %875 = vmatpush1.msra.mxu0 0.0
        %876 = vmatprep.subr.mxu0 0.0
        %877 = vmatpush1.msra.mxu0 0.0
        %878 = vmatprep.subr.mxu0 0.0
        %879 = vmatpush1.msra.mxu0 0.0
        %880 = vmatprep.subr.mxu0 0.0
        %881 = vmatpush1.msra.mxu0 0.0
        %882 = vmatprep.subr.mxu0 0.0
        %883 = vmatpush1.msra.mxu0 0.0
        %884 = vmatprep.subr.mxu0 0.0
        %885 = vmatpush1.msra.mxu0 0.0
        %886 = vmatprep.mubr.f32.mxu0 0.0
        %887 = vmatmul.mubr.f32.gmra.mrb[0].mxu0 %v470
        %v888 = vpop.f32.mrb[0].mxu0
        %v889 = vadd.f32 %v820, %v888
        %v890 = vpop.f32.mrb[0].mxu0
        %891 = vdwg.mxu0
        %v892 = vmul.f32 %v889, 0.5
        %v893 = vmul.f32 %v889, 0.044715
        %v894 = vmul.f32 %v893, %v889
        %v895 = vmul.f32 %v894, %v889
        %v896 = vadd.f32 %v889, %v895
        %v897 = vmul.f32 %v896, 0.7978846
        %v898 = vtanh.pop %v897
        %v899 = vadd.f32 %v898, 1.0
        %v900 = vmul.f32 %v892, %v899
        %v901 = vlaneseq
        %v902 = vshrl.u32 %v901, 7
        %vm903 = vcmp.ge.s32.totalorder %v902, 0
        %vm904 = vcmp.lt.s32.totalorder %v902, 8
        %vm905 = vmand %vm903, %vm904
        %v906 = vlaneseq
        %v907 = vshrl.u32 %v906, 7
        %v908 = vsub.s32 0, %v907
        %v909 = vrot.slane %v810, %v908
        %v910 = vsel %vm905, %v909, 0.0
        %v911 = vlaneseq
        %v912 = vand.u32 %v911, 127
        %vm913 = vcmp.lt.s32.totalorder %v912, 64
        %915 = vset.pattern.permute.xlu0 0
        %916 = vperm.xlu0 %915, %v910
        %v917 = vpop.permute.xlu0 %916
        %919 = vset.pattern.permute.xlu0 1
        %920 = vperm.xlu0 %919, %v910
        %v921 = vpop.permute.xlu0 %920
        %v923 = vsel %vm913, %v917, %v921
        %v924 = vmul.f32 %v900, %v923
        %v925 = vld [vmem:[%s9] sm:$0x1]
        %v926 = vlaneseq
        %v927 = vshrl.u32 %v926, 7
        %v928 = vsub.s32 0, %v927
        %v929 = vrot.slane %v925, %v928
        %v930 = vmul.f32 %v917, %v929
        %v931 = vld [vmem:[%s9 + $0x1] sm:$0x1]
        %v932 = vlaneseq
        %v933 = vshrl.u32 %v932, 7
        %v934 = vsub.s32 0, %v933
        %v935 = vrot.slane %v931, %v934
        %v936 = vmul.f32 %v921, %v935
        %v937 = vadd.f32 %v930, %v936
        %v938 = vld [vmem:[%s8] sm:$0xff]
        %v939 = vld [vmem:[%s8 + $0x8] sm:$0xff]
        %v940 = vld [vmem:[%s8 + $0x10] sm:$0xff]
        %v941 = vld [vmem:[%s8 + $0x18] sm:$0xff]
        %v942 = vld [vmem:[%s8 + $0x20] sm:$0xff]
        %v943 = vld [vmem:[%s8 + $0x28] sm:$0xff]
        %v944 = vld [vmem:[%s8 + $0x30] sm:$0xff]
        %v945 = vld [vmem:[%s8 + $0x38] sm:$0xff]
        %v946 = vld [vmem:[%s8 + $0x40] sm:$0xff]
        %v947 = vld [vmem:[%s8 + $0x48] sm:$0xff]
        %v948 = vld [vmem:[%s8 + $0x50] sm:$0xff]
        %v949 = vld [vmem:[%s8 + $0x58] sm:$0xff]
        %v950 = vld [vmem:[%s8 + $0x60] sm:$0xff]
        %v951 = vld [vmem:[%s8 + $0x68] sm:$0xff]
        %v952 = vld [vmem:[%s8 + $0x70] sm:$0xff]
        %v953 = vld [vmem:[%s8 + $0x78] sm:$0xff]
        %954 = vmatprep.subr.mxu0 0.0
        %955 = vmatpush1.msra.mxu0 %v938
        %956 = vmatprep.subr.mxu0 0.0
        %957 = vmatpush1.msra.mxu0 %v939
        %958 = vmatprep.subr.mxu0 0.0
        %959 = vmatpush1.msra.mxu0 %v940
        %960 = vmatprep.subr.mxu0 0.0
        %961 = vmatpush1.msra.mxu0 %v941
        %962 = vmatprep.subr.mxu0 0.0
        %963 = vmatpush1.msra.mxu0 %v942
        %964 = vmatprep.subr.mxu0 0.0
        %965 = vmatpush1.msra.mxu0 %v943
        %966 = vmatprep.subr.mxu0 0.0
        %967 = vmatpush1.msra.mxu0 %v944
        %968 = vmatprep.subr.mxu0 0.0
        %969 = vmatpush1.msra.mxu0 %v945
        %970 = vmatprep.subr.mxu0 0.0
        %971 = vmatpush1.msra.mxu0 %v946
        %972 = vmatprep.subr.mxu0 0.0
        %973 = vmatpush1.msra.mxu0 %v947
        %974 = vmatprep.subr.mxu0 0.0
        %975 = vmatpush1.msra.mxu0 %v948
        %976 = vmatprep.subr.mxu0 0.0
        %977 = vmatpush1.msra.mxu0 %v949
        %978 = vmatprep.subr.mxu0 0.0
        %979 = vmatpush1.msra.mxu0 %v950
        %980 = vmatprep.subr.mxu0 0.0
        %981 = vmatpush1.msra.mxu0 %v951
        %982 = vmatprep.subr.mxu0 0.0
        %983 = vmatpush1.msra.mxu0 %v952
        %984 = vmatprep.subr.mxu0 0.0
        %985 = vmatpush1.msra.mxu0 %v953
        %986 = vmatprep.subr.mxu0 0.0
        %987 = vmatpush1.msra.mxu0 0.0
        %988 = vmatprep.subr.mxu0 0.0
        %989 = vmatpush1.msra.mxu0 0.0
        %990 = vmatprep.subr.mxu0 0.0
        %991 = vmatpush1.msra.mxu0 0.0
        %992 = vmatprep.subr.mxu0 0.0
        %993 = vmatpush1.msra.mxu0 0.0
        %994 = vmatprep.subr.mxu0 0.0
        %995 = vmatpush1.msra.mxu0 0.0
        %996 = vmatprep.subr.mxu0 0.0
        %997 = vmatpush1.msra.mxu0 0.0
        %998 = vmatprep.subr.mxu0 0.0
        %999 = vmatpush1.msra.mxu0 0.0
        %1000 = vmatprep.subr.mxu0 0.0
        %1001 = vmatpush1.msra.mxu0 0.0
        %1002 = vmatprep.subr.mxu0 0.0
        %1003 = vmatpush1.msra.mxu0 0.0
        %1004 = vmatprep.subr.mxu0 0.0
        %1005 = vmatpush1.msra.mxu0 0.0
        %1006 = vmatprep.subr.mxu0 0.0
        %1007 = vmatpush1.msra.mxu0 0.0
        %1008 = vmatprep.subr.mxu0 0.0
        %1009 = vmatpush1.msra.mxu0 0.0
        %1010 = vmatprep.subr.mxu0 0.0
        %1011 = vmatpush1.msra.mxu0 0.0
        %1012 = vmatprep.subr.mxu0 0.0
        %1013 = vmatpush1.msra.mxu0 0.0
        %1014 = vmatprep.subr.mxu0 0.0
        %1015 = vmatpush1.msra.mxu0 0.0
        %1016 = vmatprep.subr.mxu0 0.0
        %1017 = vmatpush1.msra.mxu0 0.0
        %1018 = vmatprep.mubr.f32.mxu0 0.0
        %1019 = vmatmul.mubr.f32.gmra.mrb[0].mxu0 %v924
        %v1020 = vpop.f32.mrb[0].mxu0
        %v1021 = vadd.f32 %v937, %v1020
        %v1022 = vpop.f32.mrb[0].mxu0
        %1023 = vdwg.mxu0
        %v1024 = vld [vmem:[%s10] sm:$0xff]
        %v1025 = vld [vmem:[%s10 + $0x8] sm:$0xff]
        %v1026 = vld [vmem:[%s10 + $0x10] sm:$0xff]
        %v1027 = vld [vmem:[%s10 + $0x18] sm:$0xff]
        %v1028 = vld [vmem:[%s11] sm:$0x1]
        %v1030 = vlaneseq
        %v1031 = vshrl.u32 %v1030, 7
        %v1032 = vsub.s32 0, %v1031
        %v1033 = vrot.slane %v1028, %v1032
        %v1036 = vsel %vm468, %v1021, 0
        %1038 = vmatprep.subr.mxu0 0.0
        %1039 = vmatpush1.msra.mxu0 %v1024
        %1040 = vmatprep.subr.mxu0 0.0
        %1041 = vmatpush1.msra.mxu0 %v1025
        %1042 = vmatprep.subr.mxu0 0.0
        %1043 = vmatpush1.msra.mxu0 %v1026
        %1044 = vmatprep.subr.mxu0 0.0
        %1045 = vmatpush1.msra.mxu0 %v1027
        %1046 = vmatprep.subr.mxu0 0.0
        %1047 = vmatpush1.msra.mxu0 0.0
        %1048 = vmatprep.subr.mxu0 0.0
        %1049 = vmatpush1.msra.mxu0 0.0
        %1050 = vmatprep.subr.mxu0 0.0
        %1051 = vmatpush1.msra.mxu0 0.0
        %1052 = vmatprep.subr.mxu0 0.0
        %1053 = vmatpush1.msra.mxu0 0.0
        %1054 = vmatprep.subr.mxu0 0.0
        %1055 = vmatpush1.msra.mxu0 0.0
        %1056 = vmatprep.subr.mxu0 0.0
        %1057 = vmatpush1.msra.mxu0 0.0
        %1058 = vmatprep.subr.mxu0 0.0
        %1059 = vmatpush1.msra.mxu0 0.0
        %1060 = vmatprep.subr.mxu0 0.0
        %1061 = vmatpush1.msra.mxu0 0.0
        %1062 = vmatprep.subr.mxu0 0.0
        %1063 = vmatpush1.msra.mxu0 0.0
        %1064 = vmatprep.subr.mxu0 0.0
        %1065 = vmatpush1.msra.mxu0 0.0
        %1066 = vmatprep.subr.mxu0 0.0
        %1067 = vmatpush1.msra.mxu0 0.0
        %1068 = vmatprep.subr.mxu0 0.0
        %1069 = vmatpush1.msra.mxu0 0.0
        %1070 = vmatprep.subr.mxu0 0.0
        %1071 = vmatpush1.msra.mxu0 0.0
        %1072 = vmatprep.subr.mxu0 0.0
        %1073 = vmatpush1.msra.mxu0 0.0
        %1074 = vmatprep.subr.mxu0 0.0
        %1075 = vmatpush1.msra.mxu0 0.0
        %1076 = vmatprep.subr.mxu0 0.0
        %1077 = vmatpush1.msra.mxu0 0.0
        %1078 = vmatprep.subr.mxu0 0.0
        %1079 = vmatpush1.msra.mxu0 0.0
        %1080 = vmatprep.subr.mxu0 0.0
        %1081 = vmatpush1.msra.mxu0 0.0
        %1082 = vmatprep.subr.mxu0 0.0
        %1083 = vmatpush1.msra.mxu0 0.0
        %1084 = vmatprep.subr.mxu0 0.0
        %1085 = vmatpush1.msra.mxu0 0.0
        %1086 = vmatprep.subr.mxu0 0.0
        %1087 = vmatpush1.msra.mxu0 0.0
        %1088 = vmatprep.subr.mxu0 0.0
        %1089 = vmatpush1.msra.mxu0 0.0
        %1090 = vmatprep.subr.mxu0 0.0
        %1091 = vmatpush1.msra.mxu0 0.0
        %1092 = vmatprep.subr.mxu0 0.0
        %1093 = vmatpush1.msra.mxu0 0.0
        %1094 = vmatprep.subr.mxu0 0.0
        %1095 = vmatpush1.msra.mxu0 0.0
        %1096 = vmatprep.subr.mxu0 0.0
        %1097 = vmatpush1.msra.mxu0 0.0
        %1098 = vmatprep.subr.mxu0 0.0
        %1099 = vmatpush1.msra.mxu0 0.0
        %1100 = vmatprep.subr.mxu0 0.0
        %1101 = vmatpush1.msra.mxu0 0.0
        %1102 = vmatprep.mubr.f32.mxu0 0.0
        %1103 = vmatmul.mubr.f32.gmra.mrb[0].mxu0 %v1036
        %v1104 = vpop.f32.mrb[0].mxu0
        %v1105 = vadd.f32 %v1033, %v1104
        %v1106 = vpop.f32.mrb[0].mxu0
        %1107 = vdwg.mxu0
        %v1108 = vtanh.pop %v1105
        %v1109 = vadd.f32 %v1021, %v1108
        %v1110 = vmul.f32 %v1109, 0.5
        %v1111 = vsel %vm468, %v1110, 0.0
        %1112 = vst [vmem:[%s446] sm:$0xff] %v1111
        %1114 = vrot.lane.b32.xlu0 %v796, 2
        %v1115 = vpop.permute.xlu0 %1114
        %vm1117 = vcmask 15360
        %v1118 = vsel %vm1117, %v810, %v1115
        %vm1119 = vcmask 105472
        %v1120 = vsel %vm1119, %v1118, 0.0
        %1121 = vst [vmem:[%s452] sm:$0x1] %v1120
        %s1122 = sand.u32 %s301, 1
        %s1123 = scalar_lea.sflag [#allocation3], %s1122
        %s1124 = sand.u32 %s301, 1
        %s1125 = smul.addr %s1124, 8
        %s1126 = scalar_lea.vmem [#allocation2], %s1125
        %s1127 = sand.u32 %s327, 1
        %s1128 = scalar_lea.sflag [#allocation5], %s1127
        %s1129 = sand.u32 %s327, 1
        %s1130 = scalar_lea.vmem [#allocation4], %s1129
        // Predicated region
        $region69: #{tpu_custom_call.1} parent=67 // pred_check
          %p1131 = pneg %p311
        $region70: #{tpu_custom_call.1} parent=67 // pred_check_branch
          %1133 = sbr.rel (%p1131) target = $region72
        $region71: #{tpu_custom_call.1} parent=67 // pred_region
          %s1135 = ssub.s32 128, 128
          %1136 = vsyncadd %s1123, %s1135
          %s1137 = smul.addr %s31, 128
          %s1138 = scalar_lea.hbm %s12, %s1137
          %s1140 = sshll.u32 %s1126, 4
          %s1141 = int_to_ptr.vmem [resolvable:$true] %s1140
          %1143 = dma.vmem_to_hbm [thread:$0]  %s1141, 128, %s1138, %s1123
        $region72: #{tpu_custom_call.1} parent=67 // pred_fallthru
          _
        // Predicated region
        $region73: #{tpu_custom_call.1} parent=67 // pred_check
          %p1144 = pneg %p337
        $region74: #{tpu_custom_call.1} parent=67 // pred_check_branch
          %1146 = sbr.rel (%p1144) target = $region76
        $region75: #{tpu_custom_call.1} parent=67 // pred_region
          %s1148 = ssub.s32 16, 16
          %1149 = vsyncadd %s1128, %s1148
          %s1150 = smul.addr %s31, 16
          %s1151 = scalar_lea.hbm %s13, %s1150
          %s1153 = sshll.u32 %s1130, 4
          %s1154 = int_to_ptr.vmem [resolvable:$true] %s1153
          %1156 = dma.vmem_to_hbm [thread:$0]  %s1154, 16, %s1151, %s1128
        $region76: #{tpu_custom_call.1} parent=67 // pred_fallthru
          _
      $region68: #{tpu_custom_call.1} parent=5 // pred_fallthru
        _
      %p1157 = scmp.le.s32.totalorder 2, %s26
      // Predicated region
      $region77: #{tpu_custom_call.1} parent=5 // pred_check
        %p1158 = pneg %p1157
      $region78: #{tpu_custom_call.1} parent=5 // pred_check_branch
        %1160 = sbr.rel (%p1158) target = $region80
      $region79: #{tpu_custom_call.1} parent=5 // pred_region
        %s1161 = ssub.s32 %s26, 2
        // Predicated region
        $region81: #{tpu_custom_call.1} parent=79 // pred_check
          %p1162 = pneg %p317
        $region82: #{tpu_custom_call.1} parent=79 // pred_check_branch
          %1164 = sbr.rel (%p1162) target = $region84
        $region83: #{tpu_custom_call.1} parent=79 // pred_region
          %s1165 = sand.u32 %s302, 1
          %s1166 = scalar_lea.sflag [#allocation3], %s1165
          %s1167 = sand.u32 %s302, 1
          %s1168 = smul.addr %s1167, 8
          %s1169 = scalar_lea.vmem [#allocation2], %s1168
          %1170 = dma.done %s1166, 128
        $region84: #{tpu_custom_call.1} parent=79 // pred_fallthru
          _
        // Predicated region
        $region85: #{tpu_custom_call.1} parent=79 // pred_check
          %p1171 = pneg %p343
        $region86: #{tpu_custom_call.1} parent=79 // pred_check_branch
          %1173 = sbr.rel (%p1171) target = $region88
        $region87: #{tpu_custom_call.1} parent=79 // pred_region
          %s1174 = sand.u32 %s328, 1
          %s1175 = scalar_lea.sflag [#allocation5], %s1174
          %s1176 = sand.u32 %s328, 1
          %s1177 = scalar_lea.vmem [#allocation4], %s1176
          %1178 = dma.done %s1175, 16
        $region88: #{tpu_custom_call.1} parent=79 // pred_fallthru
          _
      $region80: #{tpu_custom_call.1} parent=5 // pred_fallthru
        _
    $region6: #{tpu_custom_call.1} parent=1 // loop_footer
      %s30 = sadd.s32 1, %s26
    $region7: #{tpu_custom_call.1} parent=1 // loop_footer_branch
      %25 = sbr.rel target = $region3
    $region8: #{tpu_custom_call.1} parent=1 // loop_exit
      _
    %1179 = vsyncpa [#allocation3], 1
    %s1180 = scalar_lea.sflag [#allocation3], 1
    %1181 = vsyncpa %s1180, 1
    %1182 = vsyncpa [#allocation5], 1
    %s1183 = scalar_lea.sflag [#allocation5], 1
    %1184 = vsyncpa %s1183, 1

</llo_original>
